<compile_context>
chip_gen: v7x
topology: tpu7x:2x2x1
jax: 0.10.0
libtpu: 0.0.40
codegen_flags: <defaults>
</compile_context>

<pallas_src>
import jax
import jax.numpy as jnp
from jax.experimental import pallas as pl
from jax.experimental.pallas import tpu as pltpu


def _make_kernel(TB: int, H: int, W: int):
    def kernel(yt_ref, yp_ref, out_ref, acc_ref):
        j = pl.program_id(1)

        @pl.when(j == 0)
        def _():
            acc_ref[...] = jnp.zeros_like(acc_ref)

        xt = yt_ref[...]                          # (TB, H, W) native dtype
        xp = yp_ref[...]
        yt = xt.astype(jnp.float32)
        yp = xp.astype(jnp.float32)

        # bf16 operands when inputs are bf16 (permutation select is exact),
        # f32 otherwise.
        mm_dtype = jnp.bfloat16 if xt.dtype == jnp.bfloat16 else jnp.float32
        xt_mm = xt.astype(mm_dtype)
        xp_mm = xp.astype(mm_dtype)

        # Anti-identity flip matrices, rebuilt on the VPU each step
        # (H^2 + W^2 elements -- negligible next to the block work).
        rh = jax.lax.broadcasted_iota(jnp.int32, (H, H), 0)
        ch = jax.lax.broadcasted_iota(jnp.int32, (H, H), 1)
        ph = jnp.where(rh + ch == H - 1, 1.0, 0.0).astype(mm_dtype)
        rw = jax.lax.broadcasted_iota(jnp.int32, (W, W), 0)
        cw = jax.lax.broadcasted_iota(jnp.int32, (W, W), 1)
        pw = jnp.where(rw + cw == W - 1, 1.0, 0.0).astype(mm_dtype)
        ph_b = jnp.broadcast_to(ph[None, :, :], (TB, H, H))
        pw_b = jnp.broadcast_to(pw[None, :, :], (TB, W, W))

        # Batched 'bij,bjk->bik' matmuls (per-image flips).
        dn = (((2,), (1,)), ((0,), (0,)))
        yt_fh = jax.lax.dot_general(ph_b, xt_mm, dn,
                                    preferred_element_type=jnp.float32)
        yp_fh = jax.lax.dot_general(ph_b, xp_mm, dn,
                                    preferred_element_type=jnp.float32)
        yt_fw = jax.lax.dot_general(xt_mm, pw_b, dn,
                                    preferred_element_type=jnp.float32)
        yp_fw = jax.lax.dot_general(xp_mm, pw_b, dn,
                                    preferred_element_type=jnp.float32)

        d1 = jnp.abs(yt - yt_fh) - jnp.abs(yp - yp_fh)
        d2 = jnp.abs(yt_fw - yt) - jnp.abs(yp_fw - yp)
        term = d1 * d1 + d2 * d2                  # alpha = 2

        # Tiny per-step reduction: image-axis adds (VPU) + sublane reduce (XLU)
        # into a (1, W) accumulator; no full-block scratch RMW.
        part = jnp.sum(term, axis=0)                               # (H, W)
        acc_ref[...] += jnp.sum(part, axis=0, keepdims=True)       # (1, W)

        @pl.when(j == pl.num_programs(1) - 1)
        def _():
            total = jnp.sum(acc_ref[...])          # one cross-lane reduce/group
            out_ref[...] = jnp.broadcast_to(total, (1, 128))  # lane-dense store

    return kernel


def _choose_tb(B: int, H: int, W: int, itemsize: int) -> int:
    """Largest TB dividing B keeping the native block and the in-kernel f32
    working set within the VMEM budget (fits v5e/v6e/v7x with the 48 MiB
    scoped limit set below)."""
    MAX_BLOCK_BYTES = 2 * 1024 * 1024      # native bytes per input block
    MAX_WORK_BYTES = 28 * 1024 * 1024      # ~live f32 temps per grid step
    for tb in range(B, 0, -1):
        if B % tb:
            continue
        blk_bytes = tb * H * W * itemsize
        # ~8 block-sized f32 temps + the broadcast flip matrices
        work_bytes = 4 * tb * (8 * H * W + H * H + W * W)
        if blk_bytes <= MAX_BLOCK_BYTES and work_bytes <= MAX_WORK_BYTES:
            return tb
    # TODO(synk): tile within a single image (split W / pair mirrored H rows)
    # for very large H*W instead of erroring out.
    raise ValueError(
        f"GDL Pallas kernel: a single image of shape ({H}, {W}) exceeds the "
        "per-step VMEM budget; intra-image tiling is not implemented.")


def _choose_groups(num_blocks: int) -> int:
    """Number of parallel groups (megacore sharding); must divide num_blocks."""
    for g in range(min(8, num_blocks), 0, -1):
        if num_blocks % g == 0:
            return g
    return 1


def gdl_loss(y_true: jax.Array, y_pred: jax.Array) -> jax.Array:
    """y_true, y_pred: NCHW arrays (any float dtype). Returns scalar f32 loss."""
    assert y_true.shape == y_pred.shape
    N, C, H, W = y_true.shape
    B = N * C
    itemsize = jnp.dtype(y_true.dtype).itemsize

    # Free reshapes; inputs stay in native dtype in HBM.
    yt3 = y_true.reshape(B, H, W)
    yp3 = y_pred.reshape(B, H, W)

    TB = _choose_tb(B, H, W, itemsize)
    num_blocks = B // TB
    G = _choose_groups(num_blocks)
    S = num_blocks // G

    def in_map(g, j):
        return (g * S + j, 0, 0)

    flops = 4 * B * H * W * (H + W) + 10 * B * H * W
    bytes_accessed = 2 * B * H * W * itemsize + G * 128 * 4
    ce = pl.CostEstimate(flops=flops, transcendentals=0,
                         bytes_accessed=bytes_accessed)

    partials = pl.pallas_call(
        _make_kernel(TB, H, W),
        out_shape=jax.ShapeDtypeStruct((1, 128 * G), jnp.float32),
        grid_spec=pltpu.PrefetchScalarGridSpec(
            num_scalar_prefetch=0,
            grid=(G, S),
            in_specs=[
                pl.BlockSpec((TB, H, W), in_map),
                pl.BlockSpec((TB, H, W), in_map),
            ],
            out_specs=pl.BlockSpec((1, 128), lambda g, j: (0, g)),
            scratch_shapes=[pltpu.VMEM((1, W), jnp.float32)],
        ),
        compiler_params=pltpu.CompilerParams(
            dimension_semantics=("parallel", "arbitrary"),
            vmem_limit_bytes=48 * 1024 * 1024,   # fits v7x (64 MiB) and v5e/v6e
        ),
        cost_estimate=ce,
    )(yt3, yp3)

    group_sums = partials.reshape(G, 128)[:, 0]
    return jnp.sum(group_sums) * jnp.float32(1.0 / (B * H * W))


def gdl_loss_ref(y_true, y_pred):
    yt = y_true.astype(jnp.float32)
    yp = y_pred.astype(jnp.float32)
    t1 = (jnp.abs(yt - jnp.flip(yt, 2)) - jnp.abs(yp - jnp.flip(yp, 2))) ** 2
    t2 = (jnp.abs(jnp.flip(yt, 3) - yt) - jnp.abs(jnp.flip(yp, 3) - yp)) ** 2
    return jnp.mean(t1 + t2)


if __name__ == "__main__":
    key = jax.random.PRNGKey(0)
    k1, k2 = jax.random.split(key)
    N, C, H, W = 2, 4, 16, 16
    y_true = jax.random.normal(k1, (N, C, H, W), dtype=jnp.float32)
    y_pred = jax.random.normal(k2, (N, C, H, W), dtype=jnp.float32)

    loss = jax.block_until_ready(gdl_loss(y_true, y_pred))
    ref = jax.block_until_ready(gdl_loss_ref(y_true, y_pred))

    assert jnp.allclose(loss, ref, rtol=1e-5, atol=1e-6), (loss, ref)
    print("KERNEL_OK")
</pallas_src>

<mosaic_0001>
module attributes {stable_mosaic.version = 11 : i64} {
  func.func @kernel(%arg0: i32, %arg1: i32, %arg2: memref<8x16x16xf32, #tpu.memory_space<vmem>>, %arg3: memref<8x16x16xf32, #tpu.memory_space<vmem>>, %arg4: memref<1x128xf32, #tpu.memory_space<vmem>>, %arg5: memref<1x16xf32, #tpu.memory_space<vmem>>) attributes {dimension_semantics = [#tpu.dimension_semantics<parallel>, #tpu.dimension_semantics<arbitrary>], iteration_bounds = array<i64: 1, 1>, scalar_prefetch = 0 : i64, scratch_operands = 1 : i64, tpu.core_type = #tpu.core_type<tc>, window_params = [{transform_indices = @transform_0, window_bounds = array<i64: 8, 16, 16>}, {transform_indices = @transform_1, window_bounds = array<i64: 8, 16, 16>}, {transform_indices = @transform_2, window_bounds = array<i64: 1, 128>}]} {
    %c0_i32 = arith.constant 0 : i32
    %0 = arith.cmpi eq, %arg1, %c0_i32 : i32
    %1 = arith.extui %0 : i1 to i32
    %c0_i32_0 = arith.constant 0 : i32
    %2 = arith.cmpi ne, %1, %c0_i32_0 : i32
    scf.if %2 {
      %cst_22 = arith.constant 0.000000e+00 : f32
      %53 = vector.broadcast %cst_22 : f32 to vector<1x16xf32>
      %c0_23 = arith.constant 0 : index
      %c0_24 = arith.constant 0 : index
      %54 = vector.load %arg5[%c0_23, %c0_24] : memref<1x16xf32, #tpu.memory_space<vmem>>, vector<1x16xf32>
      tpu.vector_store %arg5[%c0_23, %c0_24], %53 {strides = array<i32>} : memref<1x16xf32, #tpu.memory_space<vmem>>, vector<1x16xf32>,
    } else {
    }
    %c0 = arith.constant 0 : index
    %c0_1 = arith.constant 0 : index
    %c0_2 = arith.constant 0 : index
    %3 = vector.load %arg2[%c0, %c0_1, %c0_2] : memref<8x16x16xf32, #tpu.memory_space<vmem>>, vector<8x16x16xf32>
    %c0_3 = arith.constant 0 : index
    %c0_4 = arith.constant 0 : index
    %c0_5 = arith.constant 0 : index
    %4 = vector.load %arg3[%c0_3, %c0_4, %c0_5] : memref<8x16x16xf32, #tpu.memory_space<vmem>>, vector<8x16x16xf32>
    %5 = tpu.iota {dimensions = array<i32: 0>} : vector<16x16xi32>
    %6 = tpu.iota {dimensions = array<i32: 1>} : vector<16x16xi32>
    %7 = arith.addi %5, %6 : vector<16x16xi32>
    %c15_i32 = arith.constant 15 : i32
    %8 = vector.broadcast %c15_i32 : i32 to vector<16x16xi32>
    %9 = arith.cmpi eq, %7, %8 : vector<16x16xi32>
    %cst = arith.constant 1.000000e+00 : f32
    %cst_6 = arith.constant 0.000000e+00 : f32
    %10 = vector.broadcast %cst : f32 to vector<16x16xf32>
    %11 = vector.broadcast %cst_6 : f32 to vector<16x16xf32>
    %12 = arith.select %9, %10, %11 : vector<16x16xi1>, vector<16x16xf32>
    %13 = tpu.iota {dimensions = array<i32: 0>} : vector<16x16xi32>
    %14 = tpu.iota {dimensions = array<i32: 1>} : vector<16x16xi32>
    %15 = arith.addi %13, %14 : vector<16x16xi32>
    %c15_i32_7 = arith.constant 15 : i32
    %16 = vector.broadcast %c15_i32_7 : i32 to vector<16x16xi32>
    %17 = arith.cmpi eq, %15, %16 : vector<16x16xi32>
    %cst_8 = arith.constant 1.000000e+00 : f32
    %cst_9 = arith.constant 0.000000e+00 : f32
    %18 = vector.broadcast %cst_8 : f32 to vector<16x16xf32>
    %19 = vector.broadcast %cst_9 : f32 to vector<16x16xf32>
    %20 = arith.select %17, %18, %19 : vector<16x16xi1>, vector<16x16xf32>
    %21 = vector.shape_cast %12 : vector<16x16xf32> to vector<1x16x16xf32>
    %22 = vector.shape_cast %21 : vector<1x16x16xf32> to vector<1x16x16xf32>
    %23 = vector.broadcast %22 : vector<1x16x16xf32> to vector<8x16x16xf32>
    %24 = vector.shape_cast %20 : vector<16x16xf32> to vector<1x16x16xf32>
    %25 = vector.shape_cast %24 : vector<1x16x16xf32> to vector<1x16x16xf32>
    %26 = vector.broadcast %25 : vector<1x16x16xf32> to vector<8x16x16xf32>
    %cst_10 = arith.constant dense<0.000000e+00> : vector<8x16x16xf32>
    %27 = tpu.matmul %23, %3, %cst_10 {dimension_numbers = #tpu.dot_dimension_numbers<[2], [1], [1], [2], [0, 0, 0, 1, 1, 2], [0], [0]>} : vector<8x16x16xf32>, vector<8x16x16xf32>, vector<8x16x16xf32> -> vector<8x16x16xf32>
    %cst_11 = arith.constant dense<0.000000e+00> : vector<8x16x16xf32>
    %28 = tpu.matmul %23, %4, %cst_11 {dimension_numbers = #tpu.dot_dimension_numbers<[2], [1], [1], [2], [0, 0, 0, 1, 1, 2], [0], [0]>} : vector<8x16x16xf32>, vector<8x16x16xf32>, vector<8x16x16xf32> -> vector<8x16x16xf32>
    %cst_12 = arith.constant dense<0.000000e+00> : vector<8x16x16xf32>
    %29 = tpu.matmul %3, %26, %cst_12 {dimension_numbers = #tpu.dot_dimension_numbers<[2], [1], [1], [2], [0, 0, 0, 1, 1, 2], [0], [0]>} : vector<8x16x16xf32>, vector<8x16x16xf32>, vector<8x16x16xf32> -> vector<8x16x16xf32>
    %cst_13 = arith.constant dense<0.000000e+00> : vector<8x16x16xf32>
    %30 = tpu.matmul %4, %26, %cst_13 {dimension_numbers = #tpu.dot_dimension_numbers<[2], [1], [1], [2], [0, 0, 0, 1, 1, 2], [0], [0]>} : vector<8x16x16xf32>, vector<8x16x16xf32>, vector<8x16x16xf32> -> vector<8x16x16xf32>
    %31 = arith.subf %3, %27 : vector<8x16x16xf32>
    %32 = math.absf %31 : vector<8x16x16xf32>
    %33 = arith.subf %4, %28 : vector<8x16x16xf32>
    %34 = math.absf %33 : vector<8x16x16xf32>
    %35 = arith.subf %32, %34 : vector<8x16x16xf32>
    %36 = arith.subf %29, %3 : vector<8x16x16xf32>
    %37 = math.absf %36 : vector<8x16x16xf32>
    %38 = arith.subf %30, %4 : vector<8x16x16xf32>
    %39 = math.absf %38 : vector<8x16x16xf32>
    %40 = arith.subf %37, %39 : vector<8x16x16xf32>
    %41 = arith.mulf %35, %35 : vector<8x16x16xf32>
    %42 = arith.mulf %40, %40 : vector<8x16x16xf32>
    %43 = arith.addf %41, %42 : vector<8x16x16xf32>
    %cst_14 = arith.constant dense<0.000000e+00> : vector<16x16xf32>
    %44 = vector.multi_reduction <add>, %43, %cst_14 [0] : vector<8x16x16xf32> to vector<16x16xf32>
    %c0_15 = arith.constant 0 : index
    %c0_16 = arith.constant 0 : index
    %45 = vector.load %arg5[%c0_15, %c0_16] : memref<1x16xf32, #tpu.memory_space<vmem>>, vector<1x16xf32>
    %cst_17 = arith.constant dense<0.000000e+00> : vector<16xf32>
    %46 = vector.multi_reduction <add>, %44, %cst_17 [0] : vector<16x16xf32> to vector<16xf32>
    %47 = vector.shape_cast %46 : vector<16xf32> to vector<1x16xf32>
    %48 = arith.addf %45, %47 : vector<1x16xf32>
    %c0_18 = arith.constant 0 : index
    %c0_19 = arith.constant 0 : index
    %49 = vector.load %arg5[%c0_18, %c0_19] : memref<1x16xf32, #tpu.memory_space<vmem>>, vector<1x16xf32>
    tpu.vector_store %arg5[%c0_18, %c0_19], %48 {strides = array<i32>} : memref<1x16xf32, #tpu.memory_space<vmem>>, vector<1x16xf32>,
    %c0_i32_20 = arith.constant 0 : i32
    %50 = arith.cmpi eq, %arg1, %c0_i32_20 : i32
    %51 = arith.extui %50 : i1 to i32
    %c0_i32_21 = arith.constant 0 : i32
    %52 = arith.cmpi ne, %51, %c0_i32_21 : i32
    scf.if %52 {
      %c0_22 = arith.constant 0 : index
      %c0_23 = arith.constant 0 : index
      %53 = vector.load %arg5[%c0_22, %c0_23] : memref<1x16xf32, #tpu.memory_space<vmem>>, vector<1x16xf32>
      %54 = vector.shape_cast %53 : vector<1x16xf32> to vector<1x1x16xf32>
      %cst_24 = arith.constant dense<0.000000e+00> : vector<1xf32>
      %55 = vector.multi_reduction <add>, %54, %cst_24 [1, 2] : vector<1x1x16xf32> to vector<1xf32>
      %56 = vector.shape_cast %55 : vector<1xf32> to vector<1x1x1xf32>
      %57 = vector.extract %56[0, 0, 0] : f32 from vector<1x1x1xf32>
      %58 = vector.broadcast %57 : f32 to vector<1x128xf32>
      %c0_25 = arith.constant 0 : index
      %c0_26 = arith.constant 0 : index
      %59 = vector.load %arg4[%c0_25, %c0_26] : memref<1x128xf32, #tpu.memory_space<vmem>>, vector<1x128xf32>
      tpu.vector_store %arg4[%c0_25, %c0_26], %58 {strides = array<i32>} : memref<1x128xf32, #tpu.memory_space<vmem>>, vector<1x128xf32>,
    } else {
    }
    return
  }
  func.func @transform_0(%arg0: i32, %arg1: i32) -> (i32, i32, i32) {
    %c1_i32 = arith.constant 1 : i32
    %0 = arith.muli %arg0, %c1_i32 : i32
    %1 = arith.addi %0, %arg1 : i32
    %c0_i32 = arith.constant 0 : i32
    %c0_i32_0 = arith.constant 0 : i32
    %c0_i32_1 = arith.constant 0 : i32
    return %1, %c0_i32, %c0_i32_0 : i32, i32, i32
  }
  func.func @transform_1(%arg0: i32, %arg1: i32) -> (i32, i32, i32) {
    %c1_i32 = arith.constant 1 : i32
    %0 = arith.muli %arg0, %c1_i32 : i32
    %1 = arith.addi %0, %arg1 : i32
    %c0_i32 = arith.constant 0 : i32
    %c0_i32_0 = arith.constant 0 : i32
    %c0_i32_1 = arith.constant 0 : i32
    return %1, %c0_i32, %c0_i32_0 : i32, i32, i32
  }
  func.func @transform_2(%arg0: i32, %arg1: i32) -> (i32, i32) {
    %c0_i32 = arith.constant 0 : i32
    %c0_i32_0 = arith.constant 0 : i32
    return %c0_i32, %arg0 : i32, i32
  }
}

</mosaic_0001>

<llo_original>
// kernel: tpu_custom_call.1
$region0: #{tpu_custom_call.1}
  #allocation0 [shape = 'u32[]', space=smem, size = 0x4, offset = 0x4, fixed_abs, tag = 'smem constant byte address 0x4 - core index']
  #allocation1 [shape = 'u32[144,128]{1,0:T(1,128)}', space=vmem, size = 0x12000, scoped, tag = 'internal scratch']
  #allocation2 [shape = 'f32[1,16]{1,0:T(1,128)}', space=vmem, size = 0x200, scoped, tag = 'scratch operand']
  %s0 = inlined_call_operand.hbm [shape: f32[8,16,16], index: 0, kind: input, shape index: {}]
  %s1 = inlined_call_operand.hbm [shape: f32[8,16,16], index: 1, kind: input, shape index: {}]
  %s2 = inlined_call_operand.hbm [shape: f32[1,128], index: 2, kind: output, shape index: {}]
  %s3 = sld [smem:[#allocation0]]
  $region34: #{tpu_custom_call.1} parent=0
    _
  %s5 = ssub.s32 1, %s3
  %s6 = scalar_select 0, %s5, %s3
  $region1: #{tpu_custom_call.1} parent=0
    #allocation3 [shape = 'u8[65536]{0}', space=vmem, size = 0x10000, scoped, tag = 'input window, operand 0, single buffered']
    #allocation4 [shape = 's32[1]{0}', space=sflag, size = 0x4, scoped, tag = 'scoped memory for tpu_custom_call.1']
    #allocation5 [shape = 's32[1]{0}', space=sflag, size = 0x4, scoped, tag = 'scoped memory for tpu_custom_call.1']
    #allocation6 [shape = 'u8[65536]{0}', space=vmem, size = 0x10000, scoped, tag = 'input window, operand 1, single buffered']
    #allocation7 [shape = 's32[1]{0}', space=sflag, size = 0x4, scoped, tag = 'scoped memory for tpu_custom_call.1']
    #allocation8 [shape = 'u8[512]{0}', space=vmem, size = 0x400, scoped, tag = 'output window, operand 0, single buffered']
    %7 = vsyncpa [#allocation4], 0
    %8 = vsyncpa [#allocation7], 0
    %9 = vsyncpa [#allocation5], 0
    // Predicated region
    $region2: #{tpu_custom_call.1} parent=1 // pred_check
      _
    $region3: #{tpu_custom_call.1} parent=1 // pred_check_branch
      %11 = sbr.rel (0) target = $region5
    $region4: #{tpu_custom_call.1} parent=1 // pred_region
      %s12 = sadd.s32 0, 0
      %s13 = smul.u32 8, %s12
      %s15 = ssub.s32 2048, 2048
      %16 = vsyncadd [#allocation4], %s15
      %s17 = smul.addr %s13, 2
      %s18 = smul.addr %s17, 128
      %s19 = scalar_lea.hbm %s0, %s18
      %s20 = sshll.u32 [#allocation3], 4
      %s21 = int_to_ptr.vmem [resolvable:$true] %s20
      %26 = dma.hbm_to_vmem [thread:$0]  %s19, 2048, %s21, [#allocation4], 128, 128, 8
    $region5: #{tpu_custom_call.1} parent=1 // pred_fallthru
      _
    // Predicated region
    $region6: #{tpu_custom_call.1} parent=1 // pred_check
      _
    $region7: #{tpu_custom_call.1} parent=1 // pred_check_branch
      %28 = sbr.rel (0) target = $region9
    $region8: #{tpu_custom_call.1} parent=1 // pred_region
      %s29 = sadd.s32 0, 0
      %s30 = smul.u32 8, %s29
      %s32 = ssub.s32 2048, 2048
      %33 = vsyncadd [#allocation7], %s32
      %s34 = smul.addr %s30, 2
      %s35 = smul.addr %s34, 128
      %s36 = scalar_lea.hbm %s1, %s35
      %s37 = sshll.u32 [#allocation6], 4
      %s38 = int_to_ptr.vmem [resolvable:$true] %s37
      %43 = dma.hbm_to_vmem [thread:$0]  %s36, 2048, %s38, [#allocation7], 128, 128, 8
    $region9: #{tpu_custom_call.1} parent=1 // pred_fallthru
      _
    // Predicated region
    $region10: #{tpu_custom_call.1} parent=1 // pred_check
      _
    $region11: #{tpu_custom_call.1} parent=1 // pred_check_branch
      %45 = sbr.rel (0) target = $region13
    $region12: #{tpu_custom_call.1} parent=1 // pred_region
      %46 = dma.done [#allocation4], 2048
    $region13: #{tpu_custom_call.1} parent=1 // pred_fallthru
      _
    // Predicated region
    $region14: #{tpu_custom_call.1} parent=1 // pred_check
      _
    $region15: #{tpu_custom_call.1} parent=1 // pred_check_branch
      %48 = sbr.rel (0) target = $region17
    $region16: #{tpu_custom_call.1} parent=1 // pred_region
      %49 = dma.done [#allocation7], 2048
    $region17: #{tpu_custom_call.1} parent=1 // pred_fallthru
      _
    %s50 = sadd.s32 0, 0
    %s51 = smul.u32 8, %s50
    %s52 = sadd.s32 0, 0
    %s53 = smul.u32 8, %s52
    %p54 = scmp.eq.s32.totalorder 0, 0
    // Predicated region
    $region18: #{tpu_custom_call.1} parent=1 // pred_check
      %p55 = pneg %p54
    $region19: #{tpu_custom_call.1} parent=1 // pred_check_branch
      %57 = sbr.rel (%p55) target = $region21
    $region20: #{tpu_custom_call.1} parent=1 // pred_region
      %vm58 = vcmask 122880
      %59 = vst.msk [vmem:[#allocation2] sm:$0x1] %vm58, 0.0
    $region21: #{tpu_custom_call.1} parent=1 // pred_fallthru
      _
    %v60 = vld [vmem:[#allocation3] sm:$0xff]
    %v61 = vld [vmem:[#allocation3 + $0x8] sm:$0xff]
    %v62 = vld [vmem:[#allocation3 + $0x10] sm:$0xff]
    %v63 = vld [vmem:[#allocation3 + $0x18] sm:$0xff]
    %v64 = vld [vmem:[#allocation3 + $0x20] sm:$0xff]
    %v65 = vld [vmem:[#allocation3 + $0x28] sm:$0xff]
    %v66 = vld [vmem:[#allocation3 + $0x30] sm:$0xff]
    %v67 = vld [vmem:[#allocation3 + $0x38] sm:$0xff]
    %v68 = vld [vmem:[#allocation3 + $0x40] sm:$0xff]
    %v69 = vld [vmem:[#allocation3 + $0x48] sm:$0xff]
    %v70 = vld [vmem:[#allocation3 + $0x50] sm:$0xff]
    %v71 = vld [vmem:[#allocation3 + $0x58] sm:$0xff]
    %v72 = vld [vmem:[#allocation3 + $0x60] sm:$0xff]
    %v73 = vld [vmem:[#allocation3 + $0x68] sm:$0xff]
    %v74 = vld [vmem:[#allocation3 + $0x70] sm:$0xff]
    %v75 = vld [vmem:[#allocation3 + $0x78] sm:$0xff]
    %v76 = vld [vmem:[#allocation6] sm:$0xff]
    %v77 = vld [vmem:[#allocation6 + $0x8] sm:$0xff]
    %v78 = vld [vmem:[#allocation6 + $0x10] sm:$0xff]
    %v79 = vld [vmem:[#allocation6 + $0x18] sm:$0xff]
    %v80 = vld [vmem:[#allocation6 + $0x20] sm:$0xff]
    %v81 = vld [vmem:[#allocation6 + $0x28] sm:$0xff]
    %v82 = vld [vmem:[#allocation6 + $0x30] sm:$0xff]
    %v83 = vld [vmem:[#allocation6 + $0x38] sm:$0xff]
    %v84 = vld [vmem:[#allocation6 + $0x40] sm:$0xff]
    %v85 = vld [vmem:[#allocation6 + $0x48] sm:$0xff]
    %v86 = vld [vmem:[#allocation6 + $0x50] sm:$0xff]
    %v87 = vld [vmem:[#allocation6 + $0x58] sm:$0xff]
    %v88 = vld [vmem:[#allocation6 + $0x60] sm:$0xff]
    %v89 = vld [vmem:[#allocation6 + $0x68] sm:$0xff]
    %v90 = vld [vmem:[#allocation6 + $0x70] sm:$0xff]
    %v91 = vld [vmem:[#allocation6 + $0x78] sm:$0xff]
    %v92 = vlaneseq
    %v93 = vshrl.u32 %v92, 7
    %v94 = vadd.s32 %v93, 8
    %v95 = vlaneseq
    %v96 = vand.u32 %v95, 127
    %v97 = vadd.s32 %v93, %v96
    %v98 = vadd.s32 %v94, %v96
    %vm99 = vcmp.eq.s32.totalorder %v97, 15
    %vm100 = vcmp.eq.s32.totalorder %v98, 15
    %v101 = vsel %vm99, 1.0, 0.0
    %v102 = vsel %vm100, 1.0, 0.0
    %vm103 = vcmask 130048
    %v105 = vsel %vm103, %v101, 0
    %v108 = vsel %vm103, %v102, 0
    %110 = vmatprep.subr.mxu0 0.0
    %111 = vmatpush1.msra.mxu0 %v60
    %112 = vmatprep.subr.mxu0 0.0
    %113 = vmatpush1.msra.mxu0 %v61
    %114 = vmatprep.subr.mxu0 0.0
    %115 = vmatpush1.msra.mxu0 0.0
    %116 = vmatprep.subr.mxu0 0.0
    %117 = vmatpush1.msra.mxu0 0.0
    %118 = vmatprep.subr.mxu0 0.0
    %119 = vmatpush1.msra.mxu0 0.0
    %120 = vmatprep.subr.mxu0 0.0
    %121 = vmatpush1.msra.mxu0 0.0
    %122 = vmatprep.subr.mxu0 0.0
    %123 = vmatpush1.msra.mxu0 0.0
    %124 = vmatprep.subr.mxu0 0.0
    %125 = vmatpush1.msra.mxu0 0.0
    %126 = vmatprep.subr.mxu0 0.0
    %127 = vmatpush1.msra.mxu0 0.0
    %128 = vmatprep.subr.mxu0 0.0
    %129 = vmatpush1.msra.mxu0 0.0
    %130 = vmatprep.subr.mxu0 0.0
    %131 = vmatpush1.msra.mxu0 0.0
    %132 = vmatprep.subr.mxu0 0.0
    %133 = vmatpush1.msra.mxu0 0.0
    %134 = vmatprep.subr.mxu0 0.0
    %135 = vmatpush1.msra.mxu0 0.0
    %136 = vmatprep.subr.mxu0 0.0
    %137 = vmatpush1.msra.mxu0 0.0
    %138 = vmatprep.subr.mxu0 0.0
    %139 = vmatpush1.msra.mxu0 0.0
    %140 = vmatprep.subr.mxu0 0.0
    %141 = vmatpush1.msra.mxu0 0.0
    %142 = vmatprep.subr.mxu0 0.0
    %143 = vmatpush1.msra.mxu0 0.0
    %144 = vmatprep.subr.mxu0 0.0
    %145 = vmatpush1.msra.mxu0 0.0
    %146 = vmatprep.subr.mxu0 0.0
    %147 = vmatpush1.msra.mxu0 0.0
    %148 = vmatprep.subr.mxu0 0.0
    %149 = vmatpush1.msra.mxu0 0.0
    %150 = vmatprep.subr.mxu0 0.0
    %151 = vmatpush1.msra.mxu0 0.0
    %152 = vmatprep.subr.mxu0 0.0
    %153 = vmatpush1.msra.mxu0 0.0
    %154 = vmatprep.subr.mxu0 0.0
    %155 = vmatpush1.msra.mxu0 0.0
    %156 = vmatprep.subr.mxu0 0.0
    %157 = vmatpush1.msra.mxu0 0.0
    %158 = vmatprep.subr.mxu0 0.0
    %159 = vmatpush1.msra.mxu0 0.0
    %160 = vmatprep.subr.mxu0 0.0
    %161 = vmatpush1.msra.mxu0 0.0
    %162 = vmatprep.subr.mxu0 0.0
    %163 = vmatpush1.msra.mxu0 0.0
    %164 = vmatprep.subr.mxu0 0.0
    %165 = vmatpush1.msra.mxu0 0.0
    %166 = vmatprep.subr.mxu0 0.0
    %167 = vmatpush1.msra.mxu0 0.0
    %168 = vmatprep.subr.mxu0 0.0
    %169 = vmatpush1.msra.mxu0 0.0
    %170 = vmatprep.subr.mxu0 0.0
    %171 = vmatpush1.msra.mxu0 0.0
    %172 = vmatprep.subr.mxu0 0.0
    %173 = vmatpush1.msra.mxu0 0.0
    %174 = vmatprep.mubr.f32.mxu0 0.0
    %175 = vmatmul.mubr.f32.gmra.mrb[0].mxu0 %v105
    %v176 = vpop.f32.mrb[0].mxu0
    %v177 = vadd.f32 0.0, %v176
    %v178 = vpop.f32.mrb[0].mxu0
    %179 = vmatprep.mubr.f32.mxu0 0.0
    %180 = vmatmul.mubr.f32.gmra.mrb[0].mxu0 %v108
    %v181 = vpop.f32.mrb[0].mxu0
    %v182 = vadd.f32 0.0, %v181
    %v183 = vpop.f32.mrb[0].mxu0
    %184 = vdwg.mxu0
    %185 = vmatprep.subr.mxu0 0.0
    %186 = vmatpush1.msra.mxu0 %v62
    %187 = vmatprep.subr.mxu0 0.0
    %188 = vmatpush1.msra.mxu0 %v63
    %189 = vmatprep.subr.mxu0 0.0
    %190 = vmatpush1.msra.mxu0 0.0
    %191 = vmatprep.subr.mxu0 0.0
    %192 = vmatpush1.msra.mxu0 0.0
    %193 = vmatprep.subr.mxu0 0.0
    %194 = vmatpush1.msra.mxu0 0.0
    %195 = vmatprep.subr.mxu0 0.0
    %196 = vmatpush1.msra.mxu0 0.0
    %197 = vmatprep.subr.mxu0 0.0
    %198 = vmatpush1.msra.mxu0 0.0
    %199 = vmatprep.subr.mxu0 0.0
    %200 = vmatpush1.msra.mxu0 0.0
    %201 = vmatprep.subr.mxu0 0.0
    %202 = vmatpush1.msra.mxu0 0.0
    %203 = vmatprep.subr.mxu0 0.0
    %204 = vmatpush1.msra.mxu0 0.0
    %205 = vmatprep.subr.mxu0 0.0
    %206 = vmatpush1.msra.mxu0 0.0
    %207 = vmatprep.subr.mxu0 0.0
    %208 = vmatpush1.msra.mxu0 0.0
    %209 = vmatprep.subr.mxu0 0.0
    %210 = vmatpush1.msra.mxu0 0.0
    %211 = vmatprep.subr.mxu0 0.0
    %212 = vmatpush1.msra.mxu0 0.0
    %213 = vmatprep.subr.mxu0 0.0
    %214 = vmatpush1.msra.mxu0 0.0
    %215 = vmatprep.subr.mxu0 0.0
    %216 = vmatpush1.msra.mxu0 0.0
    %217 = vmatprep.subr.mxu0 0.0
    %218 = vmatpush1.msra.mxu0 0.0
    %219 = vmatprep.subr.mxu0 0.0
    %220 = vmatpush1.msra.mxu0 0.0
    %221 = vmatprep.subr.mxu0 0.0
    %222 = vmatpush1.msra.mxu0 0.0
    %223 = vmatprep.subr.mxu0 0.0
    %224 = vmatpush1.msra.mxu0 0.0
    %225 = vmatprep.subr.mxu0 0.0
    %226 = vmatpush1.msra.mxu0 0.0
    %227 = vmatprep.subr.mxu0 0.0
    %228 = vmatpush1.msra.mxu0 0.0
    %229 = vmatprep.subr.mxu0 0.0
    %230 = vmatpush1.msra.mxu0 0.0
    %231 = vmatprep.subr.mxu0 0.0
    %232 = vmatpush1.msra.mxu0 0.0
    %233 = vmatprep.subr.mxu0 0.0
    %234 = vmatpush1.msra.mxu0 0.0
    %235 = vmatprep.subr.mxu0 0.0
    %236 = vmatpush1.msra.mxu0 0.0
    %237 = vmatprep.subr.mxu0 0.0
    %238 = vmatpush1.msra.mxu0 0.0
    %239 = vmatprep.subr.mxu0 0.0
    %240 = vmatpush1.msra.mxu0 0.0
    %241 = vmatprep.subr.mxu0 0.0
    %242 = vmatpush1.msra.mxu0 0.0
    %243 = vmatprep.subr.mxu0 0.0
    %244 = vmatpush1.msra.mxu0 0.0
    %245 = vmatprep.subr.mxu0 0.0
    %246 = vmatpush1.msra.mxu0 0.0
    %247 = vmatprep.subr.mxu0 0.0
    %248 = vmatpush1.msra.mxu0 0.0
    %249 = vmatprep.mubr.f32.mxu0 0.0
    %250 = vmatmul.mubr.f32.gmra.mrb[0].mxu0 %v105
    %v251 = vpop.f32.mrb[0].mxu0
    %v252 = vadd.f32 0.0, %v251
    %v253 = vpop.f32.mrb[0].mxu0
    %254 = vmatprep.mubr.f32.mxu0 0.0
    %255 = vmatmul.mubr.f32.gmra.mrb[0].mxu0 %v108
    %v256 = vpop.f32.mrb[0].mxu0
    %v257 = vadd.f32 0.0, %v256
    %v258 = vpop.f32.mrb[0].mxu0
    %259 = vdwg.mxu0
    %260 = vmatprep.subr.mxu0 0.0
    %261 = vmatpush1.msra.mxu0 %v64
    %262 = vmatprep.subr.mxu0 0.0
    %263 = vmatpush1.msra.mxu0 %v65
    %264 = vmatprep.subr.mxu0 0.0
    %265 = vmatpush1.msra.mxu0 0.0
    %266 = vmatprep.subr.mxu0 0.0
    %267 = vmatpush1.msra.mxu0 0.0
    %268 = vmatprep.subr.mxu0 0.0
    %269 = vmatpush1.msra.mxu0 0.0
    %270 = vmatprep.subr.mxu0 0.0
    %271 = vmatpush1.msra.mxu0 0.0
    %272 = vmatprep.subr.mxu0 0.0
    %273 = vmatpush1.msra.mxu0 0.0
    %274 = vmatprep.subr.mxu0 0.0
    %275 = vmatpush1.msra.mxu0 0.0
    %276 = vmatprep.subr.mxu0 0.0
    %277 = vmatpush1.msra.mxu0 0.0
    %278 = vmatprep.subr.mxu0 0.0
    %279 = vmatpush1.msra.mxu0 0.0
    %280 = vmatprep.subr.mxu0 0.0
    %281 = vmatpush1.msra.mxu0 0.0
    %282 = vmatprep.subr.mxu0 0.0
    %283 = vmatpush1.msra.mxu0 0.0
    %284 = vmatprep.subr.mxu0 0.0
    %285 = vmatpush1.msra.mxu0 0.0
    %286 = vmatprep.subr.mxu0 0.0
    %287 = vmatpush1.msra.mxu0 0.0
    %288 = vmatprep.subr.mxu0 0.0
    %289 = vmatpush1.msra.mxu0 0.0
    %290 = vmatprep.subr.mxu0 0.0
    %291 = vmatpush1.msra.mxu0 0.0
    %292 = vmatprep.subr.mxu0 0.0
    %293 = vmatpush1.msra.mxu0 0.0
    %294 = vmatprep.subr.mxu0 0.0
    %295 = vmatpush1.msra.mxu0 0.0
    %296 = vmatprep.subr.mxu0 0.0
    %297 = vmatpush1.msra.mxu0 0.0
    %298 = vmatprep.subr.mxu0 0.0
    %299 = vmatpush1.msra.mxu0 0.0
    %300 = vmatprep.subr.mxu0 0.0
    %301 = vmatpush1.msra.mxu0 0.0
    %302 = vmatprep.subr.mxu0 0.0
    %303 = vmatpush1.msra.mxu0 0.0
    %304 = vmatprep.subr.mxu0 0.0
    %305 = vmatpush1.msra.mxu0 0.0
    %306 = vmatprep.subr.mxu0 0.0
    %307 = vmatpush1.msra.mxu0 0.0
    %308 = vmatprep.subr.mxu0 0.0
    %309 = vmatpush1.msra.mxu0 0.0
    %310 = vmatprep.subr.mxu0 0.0
    %311 = vmatpush1.msra.mxu0 0.0
    %312 = vmatprep.subr.mxu0 0.0
    %313 = vmatpush1.msra.mxu0 0.0
    %314 = vmatprep.subr.mxu0 0.0
    %315 = vmatpush1.msra.mxu0 0.0
    %316 = vmatprep.subr.mxu0 0.0
    %317 = vmatpush1.msra.mxu0 0.0
    %318 = vmatprep.subr.mxu0 0.0
    %319 = vmatpush1.msra.mxu0 0.0
    %320 = vmatprep.subr.mxu0 0.0
    %321 = vmatpush1.msra.mxu0 0.0
    %322 = vmatprep.subr.mxu0 0.0
    %323 = vmatpush1.msra.mxu0 0.0
    %324 = vmatprep.mubr.f32.mxu0 0.0
    %325 = vmatmul.mubr.f32.gmra.mrb[0].mxu0 %v105
    %v326 = vpop.f32.mrb[0].mxu0
    %v327 = vadd.f32 0.0, %v326
    %v328 = vpop.f32.mrb[0].mxu0
    %329 = vmatprep.mubr.f32.mxu0 0.0
    %330 = vmatmul.mubr.f32.gmra.mrb[0].mxu0 %v108
    %v331 = vpop.f32.mrb[0].mxu0
    %v332 = vadd.f32 0.0, %v331
    %v333 = vpop.f32.mrb[0].mxu0
    %334 = vdwg.mxu0
    %335 = vmatprep.subr.mxu0 0.0
    %336 = vmatpush1.msra.mxu0 %v66
    %337 = vmatprep.subr.mxu0 0.0
    %338 = vmatpush1.msra.mxu0 %v67
    %339 = vmatprep.subr.mxu0 0.0
    %340 = vmatpush1.msra.mxu0 0.0
    %341 = vmatprep.subr.mxu0 0.0
    %342 = vmatpush1.msra.mxu0 0.0
    %343 = vmatprep.subr.mxu0 0.0
    %344 = vmatpush1.msra.mxu0 0.0
    %345 = vmatprep.subr.mxu0 0.0
    %346 = vmatpush1.msra.mxu0 0.0
    %347 = vmatprep.subr.mxu0 0.0
    %348 = vmatpush1.msra.mxu0 0.0
    %349 = vmatprep.subr.mxu0 0.0
    %350 = vmatpush1.msra.mxu0 0.0
    %351 = vmatprep.subr.mxu0 0.0
    %352 = vmatpush1.msra.mxu0 0.0
    %353 = vmatprep.subr.mxu0 0.0
    %354 = vmatpush1.msra.mxu0 0.0
    %355 = vmatprep.subr.mxu0 0.0
    %356 = vmatpush1.msra.mxu0 0.0
    %357 = vmatprep.subr.mxu0 0.0
    %358 = vmatpush1.msra.mxu0 0.0
    %359 = vmatprep.subr.mxu0 0.0
    %360 = vmatpush1.msra.mxu0 0.0
    %361 = vmatprep.subr.mxu0 0.0
    %362 = vmatpush1.msra.mxu0 0.0
    %363 = vmatprep.subr.mxu0 0.0
    %364 = vmatpush1.msra.mxu0 0.0
    %365 = vmatprep.subr.mxu0 0.0
    %366 = vmatpush1.msra.mxu0 0.0
    %367 = vmatprep.subr.mxu0 0.0
    %368 = vmatpush1.msra.mxu0 0.0
    %369 = vmatprep.subr.mxu0 0.0
    %370 = vmatpush1.msra.mxu0 0.0
    %371 = vmatprep.subr.mxu0 0.0
    %372 = vmatpush1.msra.mxu0 0.0
    %373 = vmatprep.subr.mxu0 0.0
    %374 = vmatpush1.msra.mxu0 0.0
    %375 = vmatprep.subr.mxu0 0.0
    %376 = vmatpush1.msra.mxu0 0.0
    %377 = vmatprep.subr.mxu0 0.0
    %378 = vmatpush1.msra.mxu0 0.0
    %379 = vmatprep.subr.mxu0 0.0
    %380 = vmatpush1.msra.mxu0 0.0
    %381 = vmatprep.subr.mxu0 0.0
    %382 = vmatpush1.msra.mxu0 0.0
    %383 = vmatprep.subr.mxu0 0.0
    %384 = vmatpush1.msra.mxu0 0.0
    %385 = vmatprep.subr.mxu0 0.0
    %386 = vmatpush1.msra.mxu0 0.0
    %387 = vmatprep.subr.mxu0 0.0
    %388 = vmatpush1.msra.mxu0 0.0
    %389 = vmatprep.subr.mxu0 0.0
    %390 = vmatpush1.msra.mxu0 0.0
    %391 = vmatprep.subr.mxu0 0.0
    %392 = vmatpush1.msra.mxu0 0.0
    %393 = vmatprep.subr.mxu0 0.0
    %394 = vmatpush1.msra.mxu0 0.0
    %395 = vmatprep.subr.mxu0 0.0
    %396 = vmatpush1.msra.mxu0 0.0
    %397 = vmatprep.subr.mxu0 0.0
    %398 = vmatpush1.msra.mxu0 0.0
    %399 = vmatprep.mubr.f32.mxu0 0.0
    %400 = vmatmul.mubr.f32.gmra.mrb[0].mxu0 %v105
    %v401 = vpop.f32.mrb[0].mxu0
    %v402 = vadd.f32 0.0, %v401
    %v403 = vpop.f32.mrb[0].mxu0
    %404 = vmatprep.mubr.f32.mxu0 0.0
    %405 = vmatmul.mubr.f32.gmra.mrb[0].mxu0 %v108
    %v406 = vpop.f32.mrb[0].mxu0
    %v407 = vadd.f32 0.0, %v406
    %v408 = vpop.f32.mrb[0].mxu0
    %409 = vdwg.mxu0
    %410 = vmatprep.subr.mxu0 0.0
    %411 = vmatpush1.msra.mxu0 %v68
    %412 = vmatprep.subr.mxu0 0.0
    %413 = vmatpush1.msra.mxu0 %v69
    %414 = vmatprep.subr.mxu0 0.0
    %415 = vmatpush1.msra.mxu0 0.0
    %416 = vmatprep.subr.mxu0 0.0
    %417 = vmatpush1.msra.mxu0 0.0
    %418 = vmatprep.subr.mxu0 0.0
    %419 = vmatpush1.msra.mxu0 0.0
    %420 = vmatprep.subr.mxu0 0.0
    %421 = vmatpush1.msra.mxu0 0.0
    %422 = vmatprep.subr.mxu0 0.0
    %423 = vmatpush1.msra.mxu0 0.0
    %424 = vmatprep.subr.mxu0 0.0
    %425 = vmatpush1.msra.mxu0 0.0
    %426 = vmatprep.subr.mxu0 0.0
    %427 = vmatpush1.msra.mxu0 0.0
    %428 = vmatprep.subr.mxu0 0.0
    %429 = vmatpush1.msra.mxu0 0.0
    %430 = vmatprep.subr.mxu0 0.0
    %431 = vmatpush1.msra.mxu0 0.0
    %432 = vmatprep.subr.mxu0 0.0
    %433 = vmatpush1.msra.mxu0 0.0
    %434 = vmatprep.subr.mxu0 0.0
    %435 = vmatpush1.msra.mxu0 0.0
    %436 = vmatprep.subr.mxu0 0.0
    %437 = vmatpush1.msra.mxu0 0.0
    %438 = vmatprep.subr.mxu0 0.0
    %439 = vmatpush1.msra.mxu0 0.0
    %440 = vmatprep.subr.mxu0 0.0
    %441 = vmatpush1.msra.mxu0 0.0
    %442 = vmatprep.subr.mxu0 0.0
    %443 = vmatpush1.msra.mxu0 0.0
    %444 = vmatprep.subr.mxu0 0.0
    %445 = vmatpush1.msra.mxu0 0.0
    %446 = vmatprep.subr.mxu0 0.0
    %447 = vmatpush1.msra.mxu0 0.0
    %448 = vmatprep.subr.mxu0 0.0
    %449 = vmatpush1.msra.mxu0 0.0
    %450 = vmatprep.subr.mxu0 0.0
    %451 = vmatpush1.msra.mxu0 0.0
    %452 = vmatprep.subr.mxu0 0.0
    %453 = vmatpush1.msra.mxu0 0.0
    %454 = vmatprep.subr.mxu0 0.0
    %455 = vmatpush1.msra.mxu0 0.0
    %456 = vmatprep.subr.mxu0 0.0
    %457 = vmatpush1.msra.mxu0 0.0
    %458 = vmatprep.subr.mxu0 0.0
    %459 = vmatpush1.msra.mxu0 0.0
    %460 = vmatprep.subr.mxu0 0.0
    %461 = vmatpush1.msra.mxu0 0.0
    %462 = vmatprep.subr.mxu0 0.0
    %463 = vmatpush1.msra.mxu0 0.0
    %464 = vmatprep.subr.mxu0 0.0
    %465 = vmatpush1.msra.mxu0 0.0
    %466 = vmatprep.subr.mxu0 0.0
    %467 = vmatpush1.msra.mxu0 0.0
    %468 = vmatprep.subr.mxu0 0.0
    %469 = vmatpush1.msra.mxu0 0.0
    %470 = vmatprep.subr.mxu0 0.0
    %471 = vmatpush1.msra.mxu0 0.0
    %472 = vmatprep.subr.mxu0 0.0
    %473 = vmatpush1.msra.mxu0 0.0
    %474 = vmatprep.mubr.f32.mxu0 0.0
    %475 = vmatmul.mubr.f32.gmra.mrb[0].mxu0 %v105
    %v476 = vpop.f32.mrb[0].mxu0
    %v477 = vadd.f32 0.0, %v476
    %v478 = vpop.f32.mrb[0].mxu0
    %479 = vmatprep.mubr.f32.mxu0 0.0
    %480 = vmatmul.mubr.f32.gmra.mrb[0].mxu0 %v108
    %v481 = vpop.f32.mrb[0].mxu0
    %v482 = vadd.f32 0.0, %v481
    %v483 = vpop.f32.mrb[0].mxu0
    %484 = vdwg.mxu0
    %485 = vmatprep.subr.mxu0 0.0
    %486 = vmatpush1.msra.mxu0 %v70
    %487 = vmatprep.subr.mxu0 0.0
    %488 = vmatpush1.msra.mxu0 %v71
    %489 = vmatprep.subr.mxu0 0.0
    %490 = vmatpush1.msra.mxu0 0.0
    %491 = vmatprep.subr.mxu0 0.0
    %492 = vmatpush1.msra.mxu0 0.0
    %493 = vmatprep.subr.mxu0 0.0
    %494 = vmatpush1.msra.mxu0 0.0
    %495 = vmatprep.subr.mxu0 0.0
    %496 = vmatpush1.msra.mxu0 0.0
    %497 = vmatprep.subr.mxu0 0.0
    %498 = vmatpush1.msra.mxu0 0.0
    %499 = vmatprep.subr.mxu0 0.0
    %500 = vmatpush1.msra.mxu0 0.0
    %501 = vmatprep.subr.mxu0 0.0
    %502 = vmatpush1.msra.mxu0 0.0
    %503 = vmatprep.subr.mxu0 0.0
    %504 = vmatpush1.msra.mxu0 0.0
    %505 = vmatprep.subr.mxu0 0.0
    %506 = vmatpush1.msra.mxu0 0.0
    %507 = vmatprep.subr.mxu0 0.0
    %508 = vmatpush1.msra.mxu0 0.0
    %509 = vmatprep.subr.mxu0 0.0
    %510 = vmatpush1.msra.mxu0 0.0
    %511 = vmatprep.subr.mxu0 0.0
    %512 = vmatpush1.msra.mxu0 0.0
    %513 = vmatprep.subr.mxu0 0.0
    %514 = vmatpush1.msra.mxu0 0.0
    %515 = vmatprep.subr.mxu0 0.0
    %516 = vmatpush1.msra.mxu0 0.0
    %517 = vmatprep.subr.mxu0 0.0
    %518 = vmatpush1.msra.mxu0 0.0
    %519 = vmatprep.subr.mxu0 0.0
    %520 = vmatpush1.msra.mxu0 0.0
    %521 = vmatprep.subr.mxu0 0.0
    %522 = vmatpush1.msra.mxu0 0.0
    %523 = vmatprep.subr.mxu0 0.0
    %524 = vmatpush1.msra.mxu0 0.0
    %525 = vmatprep.subr.mxu0 0.0
    %526 = vmatpush1.msra.mxu0 0.0
    %527 = vmatprep.subr.mxu0 0.0
    %528 = vmatpush1.msra.mxu0 0.0
    %529 = vmatprep.subr.mxu0 0.0
    %530 = vmatpush1.msra.mxu0 0.0
    %531 = vmatprep.subr.mxu0 0.0
    %532 = vmatpush1.msra.mxu0 0.0
    %533 = vmatprep.subr.mxu0 0.0
    %534 = vmatpush1.msra.mxu0 0.0
    %535 = vmatprep.subr.mxu0 0.0
    %536 = vmatpush1.msra.mxu0 0.0
    %537 = vmatprep.subr.mxu0 0.0
    %538 = vmatpush1.msra.mxu0 0.0
    %539 = vmatprep.subr.mxu0 0.0
    %540 = vmatpush1.msra.mxu0 0.0
    %541 = vmatprep.subr.mxu0 0.0
    %542 = vmatpush1.msra.mxu0 0.0
    %543 = vmatprep.subr.mxu0 0.0
    %544 = vmatpush1.msra.mxu0 0.0
    %545 = vmatprep.subr.mxu0 0.0
    %546 = vmatpush1.msra.mxu0 0.0
    %547 = vmatprep.subr.mxu0 0.0
    %548 = vmatpush1.msra.mxu0 0.0
    %549 = vmatprep.mubr.f32.mxu0 0.0
    %550 = vmatmul.mubr.f32.gmra.mrb[0].mxu0 %v105
    %v551 = vpop.f32.mrb[0].mxu0
    %v552 = vadd.f32 0.0, %v551
    %v553 = vpop.f32.mrb[0].mxu0
    %554 = vmatprep.mubr.f32.mxu0 0.0
    %555 = vmatmul.mubr.f32.gmra.mrb[0].mxu0 %v108
    %v556 = vpop.f32.mrb[0].mxu0
    %v557 = vadd.f32 0.0, %v556
    %v558 = vpop.f32.mrb[0].mxu0
    %559 = vdwg.mxu0
    %560 = vmatprep.subr.mxu0 0.0
    %561 = vmatpush1.msra.mxu0 %v72
    %562 = vmatprep.subr.mxu0 0.0
    %563 = vmatpush1.msra.mxu0 %v73
    %564 = vmatprep.subr.mxu0 0.0
    %565 = vmatpush1.msra.mxu0 0.0
    %566 = vmatprep.subr.mxu0 0.0
    %567 = vmatpush1.msra.mxu0 0.0
    %568 = vmatprep.subr.mxu0 0.0
    %569 = vmatpush1.msra.mxu0 0.0
    %570 = vmatprep.subr.mxu0 0.0
    %571 = vmatpush1.msra.mxu0 0.0
    %572 = vmatprep.subr.mxu0 0.0
    %573 = vmatpush1.msra.mxu0 0.0
    %574 = vmatprep.subr.mxu0 0.0
    %575 = vmatpush1.msra.mxu0 0.0
    %576 = vmatprep.subr.mxu0 0.0
    %577 = vmatpush1.msra.mxu0 0.0
    %578 = vmatprep.subr.mxu0 0.0
    %579 = vmatpush1.msra.mxu0 0.0
    %580 = vmatprep.subr.mxu0 0.0
    %581 = vmatpush1.msra.mxu0 0.0
    %582 = vmatprep.subr.mxu0 0.0
    %583 = vmatpush1.msra.mxu0 0.0
    %584 = vmatprep.subr.mxu0 0.0
    %585 = vmatpush1.msra.mxu0 0.0
    %586 = vmatprep.subr.mxu0 0.0
    %587 = vmatpush1.msra.mxu0 0.0
    %588 = vmatprep.subr.mxu0 0.0
    %589 = vmatpush1.msra.mxu0 0.0
    %590 = vmatprep.subr.mxu0 0.0
    %591 = vmatpush1.msra.mxu0 0.0
    %592 = vmatprep.subr.mxu0 0.0
    %593 = vmatpush1.msra.mxu0 0.0
    %594 = vmatprep.subr.mxu0 0.0
    %595 = vmatpush1.msra.mxu0 0.0
    %596 = vmatprep.subr.mxu0 0.0
    %597 = vmatpush1.msra.mxu0 0.0
    %598 = vmatprep.subr.mxu0 0.0
    %599 = vmatpush1.msra.mxu0 0.0
    %600 = vmatprep.subr.mxu0 0.0
    %601 = vmatpush1.msra.mxu0 0.0
    %602 = vmatprep.subr.mxu0 0.0
    %603 = vmatpush1.msra.mxu0 0.0
    %604 = vmatprep.subr.mxu0 0.0
    %605 = vmatpush1.msra.mxu0 0.0
    %606 = vmatprep.subr.mxu0 0.0
    %607 = vmatpush1.msra.mxu0 0.0
    %608 = vmatprep.subr.mxu0 0.0
    %609 = vmatpush1.msra.mxu0 0.0
    %610 = vmatprep.subr.mxu0 0.0
    %611 = vmatpush1.msra.mxu0 0.0
    %612 = vmatprep.subr.mxu0 0.0
    %613 = vmatpush1.msra.mxu0 0.0
    %614 = vmatprep.subr.mxu0 0.0
    %615 = vmatpush1.msra.mxu0 0.0
    %616 = vmatprep.subr.mxu0 0.0
    %617 = vmatpush1.msra.mxu0 0.0
    %618 = vmatprep.subr.mxu0 0.0
    %619 = vmatpush1.msra.mxu0 0.0
    %620 = vmatprep.subr.mxu0 0.0
    %621 = vmatpush1.msra.mxu0 0.0
    %622 = vmatprep.subr.mxu0 0.0
    %623 = vmatpush1.msra.mxu0 0.0
    %624 = vmatprep.mubr.f32.mxu0 0.0
    %625 = vmatmul.mubr.f32.gmra.mrb[0].mxu0 %v105
    %v626 = vpop.f32.mrb[0].mxu0
    %v627 = vadd.f32 0.0, %v626
    %v628 = vpop.f32.mrb[0].mxu0
    %629 = vmatprep.mubr.f32.mxu0 0.0
    %630 = vmatmul.mubr.f32.gmra.mrb[0].mxu0 %v108
    %v631 = vpop.f32.mrb[0].mxu0
    %v632 = vadd.f32 0.0, %v631
    %v633 = vpop.f32.mrb[0].mxu0
    %634 = vdwg.mxu0
    %635 = vmatprep.subr.mxu0 0.0
    %636 = vmatpush1.msra.mxu0 %v74
    %637 = vmatprep.subr.mxu0 0.0
    %638 = vmatpush1.msra.mxu0 %v75
    %639 = vmatprep.subr.mxu0 0.0
    %640 = vmatpush1.msra.mxu0 0.0
    %641 = vmatprep.subr.mxu0 0.0
    %642 = vmatpush1.msra.mxu0 0.0
    %643 = vmatprep.subr.mxu0 0.0
    %644 = vmatpush1.msra.mxu0 0.0
    %645 = vmatprep.subr.mxu0 0.0
    %646 = vmatpush1.msra.mxu0 0.0
    %647 = vmatprep.subr.mxu0 0.0
    %648 = vmatpush1.msra.mxu0 0.0
    %649 = vmatprep.subr.mxu0 0.0
    %650 = vmatpush1.msra.mxu0 0.0
    %651 = vmatprep.subr.mxu0 0.0
    %652 = vmatpush1.msra.mxu0 0.0
    %653 = vmatprep.subr.mxu0 0.0
    %654 = vmatpush1.msra.mxu0 0.0
    %655 = vmatprep.subr.mxu0 0.0
    %656 = vmatpush1.msra.mxu0 0.0
    %657 = vmatprep.subr.mxu0 0.0
    %658 = vmatpush1.msra.mxu0 0.0
    %659 = vmatprep.subr.mxu0 0.0
    %660 = vmatpush1.msra.mxu0 0.0
    %661 = vmatprep.subr.mxu0 0.0
    %662 = vmatpush1.msra.mxu0 0.0
    %663 = vmatprep.subr.mxu0 0.0
    %664 = vmatpush1.msra.mxu0 0.0
    %665 = vmatprep.subr.mxu0 0.0
    %666 = vmatpush1.msra.mxu0 0.0
    %667 = vmatprep.subr.mxu0 0.0
    %668 = vmatpush1.msra.mxu0 0.0
    %669 = vmatprep.subr.mxu0 0.0
    %670 = vmatpush1.msra.mxu0 0.0
    %671 = vmatprep.subr.mxu0 0.0
    %672 = vmatpush1.msra.mxu0 0.0
    %673 = vmatprep.subr.mxu0 0.0
    %674 = vmatpush1.msra.mxu0 0.0
    %675 = vmatprep.subr.mxu0 0.0
    %676 = vmatpush1.msra.mxu0 0.0
    %677 = vmatprep.subr.mxu0 0.0
    %678 = vmatpush1.msra.mxu0 0.0
    %679 = vmatprep.subr.mxu0 0.0
    %680 = vmatpush1.msra.mxu0 0.0
    %681 = vmatprep.subr.mxu0 0.0
    %682 = vmatpush1.msra.mxu0 0.0
    %683 = vmatprep.subr.mxu0 0.0
    %684 = vmatpush1.msra.mxu0 0.0
    %685 = vmatprep.subr.mxu0 0.0
    %686 = vmatpush1.msra.mxu0 0.0
    %687 = vmatprep.subr.mxu0 0.0
    %688 = vmatpush1.msra.mxu0 0.0
    %689 = vmatprep.subr.mxu0 0.0
    %690 = vmatpush1.msra.mxu0 0.0
    %691 = vmatprep.subr.mxu0 0.0
    %692 = vmatpush1.msra.mxu0 0.0
    %693 = vmatprep.subr.mxu0 0.0
    %694 = vmatpush1.msra.mxu0 0.0
    %695 = vmatprep.subr.mxu0 0.0
    %696 = vmatpush1.msra.mxu0 0.0
    %697 = vmatprep.subr.mxu0 0.0
    %698 = vmatpush1.msra.mxu0 0.0
    %699 = vmatprep.mubr.f32.mxu0 0.0
    %700 = vmatmul.mubr.f32.gmra.mrb[0].mxu0 %v105
    %v701 = vpop.f32.mrb[0].mxu0
    %v702 = vadd.f32 0.0, %v701
    %v703 = vpop.f32.mrb[0].mxu0
    %704 = vmatprep.mubr.f32.mxu0 0.0
    %705 = vmatmul.mubr.f32.gmra.mrb[0].mxu0 %v108
    %v706 = vpop.f32.mrb[0].mxu0
    %v707 = vadd.f32 0.0, %v706
    %v708 = vpop.f32.mrb[0].mxu0
    %709 = vdwg.mxu0
    %710 = vmatprep.subr.mxu0 0.0
    %711 = vmatpush1.msra.mxu0 %v76
    %712 = vmatprep.subr.mxu0 0.0
    %713 = vmatpush1.msra.mxu0 %v77
    %714 = vmatprep.subr.mxu0 0.0
    %715 = vmatpush1.msra.mxu0 0.0
    %716 = vmatprep.subr.mxu0 0.0
    %717 = vmatpush1.msra.mxu0 0.0
    %718 = vmatprep.subr.mxu0 0.0
    %719 = vmatpush1.msra.mxu0 0.0
    %720 = vmatprep.subr.mxu0 0.0
    %721 = vmatpush1.msra.mxu0 0.0
    %722 = vmatprep.subr.mxu0 0.0
    %723 = vmatpush1.msra.mxu0 0.0
    %724 = vmatprep.subr.mxu0 0.0
    %725 = vmatpush1.msra.mxu0 0.0
    %726 = vmatprep.subr.mxu0 0.0
    %727 = vmatpush1.msra.mxu0 0.0
    %728 = vmatprep.subr.mxu0 0.0
    %729 = vmatpush1.msra.mxu0 0.0
    %730 = vmatprep.subr.mxu0 0.0
    %731 = vmatpush1.msra.mxu0 0.0
    %732 = vmatprep.subr.mxu0 0.0
    %733 = vmatpush1.msra.mxu0 0.0
    %734 = vmatprep.subr.mxu0 0.0
    %735 = vmatpush1.msra.mxu0 0.0
    %736 = vmatprep.subr.mxu0 0.0
    %737 = vmatpush1.msra.mxu0 0.0
    %738 = vmatprep.subr.mxu0 0.0
    %739 = vmatpush1.msra.mxu0 0.0
    %740 = vmatprep.subr.mxu0 0.0
    %741 = vmatpush1.msra.mxu0 0.0
    %742 = vmatprep.subr.mxu0 0.0
    %743 = vmatpush1.msra.mxu0 0.0
    %744 = vmatprep.subr.mxu0 0.0
    %745 = vmatpush1.msra.mxu0 0.0
    %746 = vmatprep.subr.mxu0 0.0
    %747 = vmatpush1.msra.mxu0 0.0
    %748 = vmatprep.subr.mxu0 0.0
    %749 = vmatpush1.msra.mxu0 0.0
    %750 = vmatprep.subr.mxu0 0.0
    %751 = vmatpush1.msra.mxu0 0.0
    %752 = vmatprep.subr.mxu0 0.0
    %753 = vmatpush1.msra.mxu0 0.0
    %754 = vmatprep.subr.mxu0 0.0
    %755 = vmatpush1.msra.mxu0 0.0
    %756 = vmatprep.subr.mxu0 0.0
    %757 = vmatpush1.msra.mxu0 0.0
    %758 = vmatprep.subr.mxu0 0.0
    %759 = vmatpush1.msra.mxu0 0.0
    %760 = vmatprep.subr.mxu0 0.0
    %761 = vmatpush1.msra.mxu0 0.0
    %762 = vmatprep.subr.mxu0 0.0
    %763 = vmatpush1.msra.mxu0 0.0
    %764 = vmatprep.subr.mxu0 0.0
    %765 = vmatpush1.msra.mxu0 0.0
    %766 = vmatprep.subr.mxu0 0.0
    %767 = vmatpush1.msra.mxu0 0.0
    %768 = vmatprep.subr.mxu0 0.0
    %769 = vmatpush1.msra.mxu0 0.0
    %770 = vmatprep.subr.mxu0 0.0
    %771 = vmatpush1.msra.mxu0 0.0
    %772 = vmatprep.subr.mxu0 0.0
    %773 = vmatpush1.msra.mxu0 0.0
    %774 = vmatprep.mubr.f32.mxu0 0.0
    %775 = vmatmul.mubr.f32.gmra.mrb[0].mxu0 %v105
    %v776 = vpop.f32.mrb[0].mxu0
    %v777 = vadd.f32 0.0, %v776
    %v778 = vpop.f32.mrb[0].mxu0
    %779 = vmatprep.mubr.f32.mxu0 0.0
    %780 = vmatmul.mubr.f32.gmra.mrb[0].mxu0 %v108
    %v781 = vpop.f32.mrb[0].mxu0
    %v782 = vadd.f32 0.0, %v781
    %v783 = vpop.f32.mrb[0].mxu0
    %784 = vdwg.mxu0
    %785 = vmatprep.subr.mxu0 0.0
    %786 = vmatpush1.msra.mxu0 %v78
    %787 = vmatprep.subr.mxu0 0.0
    %788 = vmatpush1.msra.mxu0 %v79
    %789 = vmatprep.subr.mxu0 0.0
    %790 = vmatpush1.msra.mxu0 0.0
    %791 = vmatprep.subr.mxu0 0.0
    %792 = vmatpush1.msra.mxu0 0.0
    %793 = vmatprep.subr.mxu0 0.0
    %794 = vmatpush1.msra.mxu0 0.0
    %795 = vmatprep.subr.mxu0 0.0
    %796 = vmatpush1.msra.mxu0 0.0
    %797 = vmatprep.subr.mxu0 0.0
    %798 = vmatpush1.msra.mxu0 0.0
    %799 = vmatprep.subr.mxu0 0.0
    %800 = vmatpush1.msra.mxu0 0.0
    %801 = vmatprep.subr.mxu0 0.0
    %802 = vmatpush1.msra.mxu0 0.0
    %803 = vmatprep.subr.mxu0 0.0
    %804 = vmatpush1.msra.mxu0 0.0
    %805 = vmatprep.subr.mxu0 0.0
    %806 = vmatpush1.msra.mxu0 0.0
    %807 = vmatprep.subr.mxu0 0.0
    %808 = vmatpush1.msra.mxu0 0.0
    %809 = vmatprep.subr.mxu0 0.0
    %810 = vmatpush1.msra.mxu0 0.0
    %811 = vmatprep.subr.mxu0 0.0
    %812 = vmatpush1.msra.mxu0 0.0
    %813 = vmatprep.subr.mxu0 0.0
    %814 = vmatpush1.msra.mxu0 0.0
    %815 = vmatprep.subr.mxu0 0.0
    %816 = vmatpush1.msra.mxu0 0.0
    %817 = vmatprep.subr.mxu0 0.0
    %818 = vmatpush1.msra.mxu0 0.0
    %819 = vmatprep.subr.mxu0 0.0
    %820 = vmatpush1.msra.mxu0 0.0
    %821 = vmatprep.subr.mxu0 0.0
    %822 = vmatpush1.msra.mxu0 0.0
    %823 = vmatprep.subr.mxu0 0.0
    %824 = vmatpush1.msra.mxu0 0.0
    %825 = vmatprep.subr.mxu0 0.0
    %826 = vmatpush1.msra.mxu0 0.0
    %827 = vmatprep.subr.mxu0 0.0
    %828 = vmatpush1.msra.mxu0 0.0
    %829 = vmatprep.subr.mxu0 0.0
    %830 = vmatpush1.msra.mxu0 0.0
    %831 = vmatprep.subr.mxu0 0.0
    %832 = vmatpush1.msra.mxu0 0.0
    %833 = vmatprep.subr.mxu0 0.0
    %834 = vmatpush1.msra.mxu0 0.0
    %835 = vmatprep.subr.mxu0 0.0
    %836 = vmatpush1.msra.mxu0 0.0
    %837 = vmatprep.subr.mxu0 0.0
    %838 = vmatpush1.msra.mxu0 0.0
    %839 = vmatprep.subr.mxu0 0.0
    %840 = vmatpush1.msra.mxu0 0.0
    %841 = vmatprep.subr.mxu0 0.0
    %842 = vmatpush1.msra.mxu0 0.0
    %843 = vmatprep.subr.mxu0 0.0
    %844 = vmatpush1.msra.mxu0 0.0
    %845 = vmatprep.subr.mxu0 0.0
    %846 = vmatpush1.msra.mxu0 0.0
    %847 = vmatprep.subr.mxu0 0.0
    %848 = vmatpush1.msra.mxu0 0.0
    %849 = vmatprep.mubr.f32.mxu0 0.0
    %850 = vmatmul.mubr.f32.gmra.mrb[0].mxu0 %v105
    %v851 = vpop.f32.mrb[0].mxu0
    %v852 = vadd.f32 0.0, %v851
    %v853 = vpop.f32.mrb[0].mxu0
    %854 = vmatprep.mubr.f32.mxu0 0.0
    %855 = vmatmul.mubr.f32.gmra.mrb[0].mxu0 %v108
    %v856 = vpop.f32.mrb[0].mxu0
    %v857 = vadd.f32 0.0, %v856
    %v858 = vpop.f32.mrb[0].mxu0
    %859 = vdwg.mxu0
    %860 = vmatprep.subr.mxu0 0.0
    %861 = vmatpush1.msra.mxu0 %v80
    %862 = vmatprep.subr.mxu0 0.0
    %863 = vmatpush1.msra.mxu0 %v81
    %864 = vmatprep.subr.mxu0 0.0
    %865 = vmatpush1.msra.mxu0 0.0
    %866 = vmatprep.subr.mxu0 0.0
    %867 = vmatpush1.msra.mxu0 0.0
    %868 = vmatprep.subr.mxu0 0.0
    %869 = vmatpush1.msra.mxu0 0.0
    %870 = vmatprep.subr.mxu0 0.0
    %871 = vmatpush1.msra.mxu0 0.0
    %872 = vmatprep.subr.mxu0 0.0
    %873 = vmatpush1.msra.mxu0 0.0
    %874 = vmatprep.subr.mxu0 0.0
    %875 = vmatpush1.msra.mxu0 0.0
    %876 = vmatprep.subr.mxu0 0.0
    %877 = vmatpush1.msra.mxu0 0.0
    %878 = vmatprep.subr.mxu0 0.0
    %879 = vmatpush1.msra.mxu0 0.0
    %880 = vmatprep.subr.mxu0 0.0
    %881 = vmatpush1.msra.mxu0 0.0
    %882 = vmatprep.subr.mxu0 0.0
    %883 = vmatpush1.msra.mxu0 0.0
    %884 = vmatprep.subr.mxu0 0.0
    %885 = vmatpush1.msra.mxu0 0.0
    %886 = vmatprep.subr.mxu0 0.0
    %887 = vmatpush1.msra.mxu0 0.0
    %888 = vmatprep.subr.mxu0 0.0
    %889 = vmatpush1.msra.mxu0 0.0
    %890 = vmatprep.subr.mxu0 0.0
    %891 = vmatpush1.msra.mxu0 0.0
    %892 = vmatprep.subr.mxu0 0.0
    %893 = vmatpush1.msra.mxu0 0.0
    %894 = vmatprep.subr.mxu0 0.0
    %895 = vmatpush1.msra.mxu0 0.0
    %896 = vmatprep.subr.mxu0 0.0
    %897 = vmatpush1.msra.mxu0 0.0
    %898 = vmatprep.subr.mxu0 0.0
    %899 = vmatpush1.msra.mxu0 0.0
    %900 = vmatprep.subr.mxu0 0.0
    %901 = vmatpush1.msra.mxu0 0.0
    %902 = vmatprep.subr.mxu0 0.0
    %903 = vmatpush1.msra.mxu0 0.0
    %904 = vmatprep.subr.mxu0 0.0
    %905 = vmatpush1.msra.mxu0 0.0
    %906 = vmatprep.subr.mxu0 0.0
    %907 = vmatpush1.msra.mxu0 0.0
    %908 = vmatprep.subr.mxu0 0.0
    %909 = vmatpush1.msra.mxu0 0.0
    %910 = vmatprep.subr.mxu0 0.0
    %911 = vmatpush1.msra.mxu0 0.0
    %912 = vmatprep.subr.mxu0 0.0
    %913 = vmatpush1.msra.mxu0 0.0
    %914 = vmatprep.subr.mxu0 0.0
    %915 = vmatpush1.msra.mxu0 0.0
    %916 = vmatprep.subr.mxu0 0.0
    %917 = vmatpush1.msra.mxu0 0.0
    %918 = vmatprep.subr.mxu0 0.0
    %919 = vmatpush1.msra.mxu0 0.0
    %920 = vmatprep.subr.mxu0 0.0
    %921 = vmatpush1.msra.mxu0 0.0
    %922 = vmatprep.subr.mxu0 0.0
    %923 = vmatpush1.msra.mxu0 0.0
    %924 = vmatprep.mubr.f32.mxu0 0.0
    %925 = vmatmul.mubr.f32.gmra.mrb[0].mxu0 %v105
    %v926 = vpop.f32.mrb[0].mxu0
    %v927 = vadd.f32 0.0, %v926
    %v928 = vpop.f32.mrb[0].mxu0
    %929 = vmatprep.mubr.f32.mxu0 0.0
    %930 = vmatmul.mubr.f32.gmra.mrb[0].mxu0 %v108
    %v931 = vpop.f32.mrb[0].mxu0
    %v932 = vadd.f32 0.0, %v931
    %v933 = vpop.f32.mrb[0].mxu0
    %934 = vdwg.mxu0
    %935 = vmatprep.subr.mxu0 0.0
    %936 = vmatpush1.msra.mxu0 %v82
    %937 = vmatprep.subr.mxu0 0.0
    %938 = vmatpush1.msra.mxu0 %v83
    %939 = vmatprep.subr.mxu0 0.0
    %940 = vmatpush1.msra.mxu0 0.0
    %941 = vmatprep.subr.mxu0 0.0
    %942 = vmatpush1.msra.mxu0 0.0
    %943 = vmatprep.subr.mxu0 0.0
    %944 = vmatpush1.msra.mxu0 0.0
    %945 = vmatprep.subr.mxu0 0.0
    %946 = vmatpush1.msra.mxu0 0.0
    %947 = vmatprep.subr.mxu0 0.0
    %948 = vmatpush1.msra.mxu0 0.0
    %949 = vmatprep.subr.mxu0 0.0
    %950 = vmatpush1.msra.mxu0 0.0
    %951 = vmatprep.subr.mxu0 0.0
    %952 = vmatpush1.msra.mxu0 0.0
    %953 = vmatprep.subr.mxu0 0.0
    %954 = vmatpush1.msra.mxu0 0.0
    %955 = vmatprep.subr.mxu0 0.0
    %956 = vmatpush1.msra.mxu0 0.0
    %957 = vmatprep.subr.mxu0 0.0
    %958 = vmatpush1.msra.mxu0 0.0
    %959 = vmatprep.subr.mxu0 0.0
    %960 = vmatpush1.msra.mxu0 0.0
    %961 = vmatprep.subr.mxu0 0.0
    %962 = vmatpush1.msra.mxu0 0.0
    %963 = vmatprep.subr.mxu0 0.0
    %964 = vmatpush1.msra.mxu0 0.0
    %965 = vmatprep.subr.mxu0 0.0
    %966 = vmatpush1.msra.mxu0 0.0
    %967 = vmatprep.subr.mxu0 0.0
    %968 = vmatpush1.msra.mxu0 0.0
    %969 = vmatprep.subr.mxu0 0.0
    %970 = vmatpush1.msra.mxu0 0.0
    %971 = vmatprep.subr.mxu0 0.0
    %972 = vmatpush1.msra.mxu0 0.0
    %973 = vmatprep.subr.mxu0 0.0
    %974 = vmatpush1.msra.mxu0 0.0
    %975 = vmatprep.subr.mxu0 0.0
    %976 = vmatpush1.msra.mxu0 0.0
    %977 = vmatprep.subr.mxu0 0.0
    %978 = vmatpush1.msra.mxu0 0.0
    %979 = vmatprep.subr.mxu0 0.0
    %980 = vmatpush1.msra.mxu0 0.0
    %981 = vmatprep.subr.mxu0 0.0
    %982 = vmatpush1.msra.mxu0 0.0
    %983 = vmatprep.subr.mxu0 0.0
    %984 = vmatpush1.msra.mxu0 0.0
    %985 = vmatprep.subr.mxu0 0.0
    %986 = vmatpush1.msra.mxu0 0.0
    %987 = vmatprep.subr.mxu0 0.0
    %988 = vmatpush1.msra.mxu0 0.0
    %989 = vmatprep.subr.mxu0 0.0
    %990 = vmatpush1.msra.mxu0 0.0
    %991 = vmatprep.subr.mxu0 0.0
    %992 = vmatpush1.msra.mxu0 0.0
    %993 = vmatprep.subr.mxu0 0.0
    %994 = vmatpush1.msra.mxu0 0.0
    %995 = vmatprep.subr.mxu0 0.0
    %996 = vmatpush1.msra.mxu0 0.0
    %997 = vmatprep.subr.mxu0 0.0
    %998 = vmatpush1.msra.mxu0 0.0
    %999 = vmatprep.mubr.f32.mxu0 0.0
    %1000 = vmatmul.mubr.f32.gmra.mrb[0].mxu0 %v105
    %v1001 = vpop.f32.mrb[0].mxu0
    %v1002 = vadd.f32 0.0, %v1001
    %v1003 = vpop.f32.mrb[0].mxu0
    %1004 = vmatprep.mubr.f32.mxu0 0.0
    %1005 = vmatmul.mubr.f32.gmra.mrb[0].mxu0 %v108
    %v1006 = vpop.f32.mrb[0].mxu0
    %v1007 = vadd.f32 0.0, %v1006
    %v1008 = vpop.f32.mrb[0].mxu0
    %1009 = vdwg.mxu0
    %1010 = vmatprep.subr.mxu0 0.0
    %1011 = vmatpush1.msra.mxu0 %v84
    %1012 = vmatprep.subr.mxu0 0.0
    %1013 = vmatpush1.msra.mxu0 %v85
    %1014 = vmatprep.subr.mxu0 0.0
    %1015 = vmatpush1.msra.mxu0 0.0
    %1016 = vmatprep.subr.mxu0 0.0
    %1017 = vmatpush1.msra.mxu0 0.0
    %1018 = vmatprep.subr.mxu0 0.0
    %1019 = vmatpush1.msra.mxu0 0.0
    %1020 = vmatprep.subr.mxu0 0.0
    %1021 = vmatpush1.msra.mxu0 0.0
    %1022 = vmatprep.subr.mxu0 0.0
    %1023 = vmatpush1.msra.mxu0 0.0
    %1024 = vmatprep.subr.mxu0 0.0
    %1025 = vmatpush1.msra.mxu0 0.0
    %1026 = vmatprep.subr.mxu0 0.0
    %1027 = vmatpush1.msra.mxu0 0.0
    %1028 = vmatprep.subr.mxu0 0.0
    %1029 = vmatpush1.msra.mxu0 0.0
    %1030 = vmatprep.subr.mxu0 0.0
    %1031 = vmatpush1.msra.mxu0 0.0
    %1032 = vmatprep.subr.mxu0 0.0
    %1033 = vmatpush1.msra.mxu0 0.0
    %1034 = vmatprep.subr.mxu0 0.0
    %1035 = vmatpush1.msra.mxu0 0.0
    %1036 = vmatprep.subr.mxu0 0.0
    %1037 = vmatpush1.msra.mxu0 0.0
    %1038 = vmatprep.subr.mxu0 0.0
    %1039 = vmatpush1.msra.mxu0 0.0
    %1040 = vmatprep.subr.mxu0 0.0
    %1041 = vmatpush1.msra.mxu0 0.0
    %1042 = vmatprep.subr.mxu0 0.0
    %1043 = vmatpush1.msra.mxu0 0.0
    %1044 = vmatprep.subr.mxu0 0.0
    %1045 = vmatpush1.msra.mxu0 0.0
    %1046 = vmatprep.subr.mxu0 0.0
    %1047 = vmatpush1.msra.mxu0 0.0
    %1048 = vmatprep.subr.mxu0 0.0
    %1049 = vmatpush1.msra.mxu0 0.0
    %1050 = vmatprep.subr.mxu0 0.0
    %1051 = vmatpush1.msra.mxu0 0.0
    %1052 = vmatprep.subr.mxu0 0.0
    %1053 = vmatpush1.msra.mxu0 0.0
    %1054 = vmatprep.subr.mxu0 0.0
    %1055 = vmatpush1.msra.mxu0 0.0
    %1056 = vmatprep.subr.mxu0 0.0
    %1057 = vmatpush1.msra.mxu0 0.0
    %1058 = vmatprep.subr.mxu0 0.0
    %1059 = vmatpush1.msra.mxu0 0.0
    %1060 = vmatprep.subr.mxu0 0.0
    %1061 = vmatpush1.msra.mxu0 0.0
    %1062 = vmatprep.subr.mxu0 0.0
    %1063 = vmatpush1.msra.mxu0 0.0
    %1064 = vmatprep.subr.mxu0 0.0
    %1065 = vmatpush1.msra.mxu0 0.0
    %1066 = vmatprep.subr.mxu0 0.0
    %1067 = vmatpush1.msra.mxu0 0.0
    %1068 = vmatprep.subr.mxu0 0.0
    %1069 = vmatpush1.msra.mxu0 0.0
    %1070 = vmatprep.subr.mxu0 0.0
    %1071 = vmatpush1.msra.mxu0 0.0
    %1072 = vmatprep.subr.mxu0 0.0
    %1073 = vmatpush1.msra.mxu0 0.0
    %1074 = vmatprep.mubr.f32.mxu0 0.0
    %1075 = vmatmul.mubr.f32.gmra.mrb[0].mxu0 %v105
    %v1076 = vpop.f32.mrb[0].mxu0
    %v1077 = vadd.f32 0.0, %v1076
    %v1078 = vpop.f32.mrb[0].mxu0
    %1079 = vmatprep.mubr.f32.mxu0 0.0
    %1080 = vmatmul.mubr.f32.gmra.mrb[0].mxu0 %v108
    %v1081 = vpop.f32.mrb[0].mxu0
    %v1082 = vadd.f32 0.0, %v1081
    %v1083 = vpop.f32.mrb[0].mxu0
    %1084 = vdwg.mxu0
    %1085 = vmatprep.subr.mxu0 0.0
    %1086 = vmatpush1.msra.mxu0 %v86
    %1087 = vmatprep.subr.mxu0 0.0
    %1088 = vmatpush1.msra.mxu0 %v87
    %1089 = vmatprep.subr.mxu0 0.0
    %1090 = vmatpush1.msra.mxu0 0.0
    %1091 = vmatprep.subr.mxu0 0.0
    %1092 = vmatpush1.msra.mxu0 0.0
    %1093 = vmatprep.subr.mxu0 0.0
    %1094 = vmatpush1.msra.mxu0 0.0
    %1095 = vmatprep.subr.mxu0 0.0
    %1096 = vmatpush1.msra.mxu0 0.0
    %1097 = vmatprep.subr.mxu0 0.0
    %1098 = vmatpush1.msra.mxu0 0.0
    %1099 = vmatprep.subr.mxu0 0.0
    %1100 = vmatpush1.msra.mxu0 0.0
    %1101 = vmatprep.subr.mxu0 0.0
    %1102 = vmatpush1.msra.mxu0 0.0
    %1103 = vmatprep.subr.mxu0 0.0
    %1104 = vmatpush1.msra.mxu0 0.0
    %1105 = vmatprep.subr.mxu0 0.0
    %1106 = vmatpush1.msra.mxu0 0.0
    %1107 = vmatprep.subr.mxu0 0.0
    %1108 = vmatpush1.msra.mxu0 0.0
    %1109 = vmatprep.subr.mxu0 0.0
    %1110 = vmatpush1.msra.mxu0 0.0
    %1111 = vmatprep.subr.mxu0 0.0
    %1112 = vmatpush1.msra.mxu0 0.0
    %1113 = vmatprep.subr.mxu0 0.0
    %1114 = vmatpush1.msra.mxu0 0.0
    %1115 = vmatprep.subr.mxu0 0.0
    %1116 = vmatpush1.msra.mxu0 0.0
    %1117 = vmatprep.subr.mxu0 0.0
    %1118 = vmatpush1.msra.mxu0 0.0
    %1119 = vmatprep.subr.mxu0 0.0
    %1120 = vmatpush1.msra.mxu0 0.0
    %1121 = vmatprep.subr.mxu0 0.0
    %1122 = vmatpush1.msra.mxu0 0.0
    %1123 = vmatprep.subr.mxu0 0.0
    %1124 = vmatpush1.msra.mxu0 0.0
    %1125 = vmatprep.subr.mxu0 0.0
    %1126 = vmatpush1.msra.mxu0 0.0
    %1127 = vmatprep.subr.mxu0 0.0
    %1128 = vmatpush1.msra.mxu0 0.0
    %1129 = vmatprep.subr.mxu0 0.0
    %1130 = vmatpush1.msra.mxu0 0.0
    %1131 = vmatprep.subr.mxu0 0.0
    %1132 = vmatpush1.msra.mxu0 0.0
    %1133 = vmatprep.subr.mxu0 0.0
    %1134 = vmatpush1.msra.mxu0 0.0
    %1135 = vmatprep.subr.mxu0 0.0
    %1136 = vmatpush1.msra.mxu0 0.0
    %1137 = vmatprep.subr.mxu0 0.0
    %1138 = vmatpush1.msra.mxu0 0.0
    %1139 = vmatprep.subr.mxu0 0.0
    %1140 = vmatpush1.msra.mxu0 0.0
    %1141 = vmatprep.subr.mxu0 0.0
    %1142 = vmatpush1.msra.mxu0 0.0
    %1143 = vmatprep.subr.mxu0 0.0
    %1144 = vmatpush1.msra.mxu0 0.0
    %1145 = vmatprep.subr.mxu0 0.0
    %1146 = vmatpush1.msra.mxu0 0.0
    %1147 = vmatprep.subr.mxu0 0.0
    %1148 = vmatpush1.msra.mxu0 0.0
    %1149 = vmatprep.mubr.f32.mxu0 0.0
    %1150 = vmatmul.mubr.f32.gmra.mrb[0].mxu0 %v105
    %v1151 = vpop.f32.mrb[0].mxu0
    %v1152 = vadd.f32 0.0, %v1151
    %v1153 = vpop.f32.mrb[0].mxu0
    %1154 = vmatprep.mubr.f32.mxu0 0.0
    %1155 = vmatmul.mubr.f32.gmra.mrb[0].mxu0 %v108
    %v1156 = vpop.f32.mrb[0].mxu0
    %v1157 = vadd.f32 0.0, %v1156
    %v1158 = vpop.f32.mrb[0].mxu0
    %1159 = vdwg.mxu0
    %1160 = vmatprep.subr.mxu0 0.0
    %1161 = vmatpush1.msra.mxu0 %v88
    %1162 = vmatprep.subr.mxu0 0.0
    %1163 = vmatpush1.msra.mxu0 %v89
    %1164 = vmatprep.subr.mxu0 0.0
    %1165 = vmatpush1.msra.mxu0 0.0
    %1166 = vmatprep.subr.mxu0 0.0
    %1167 = vmatpush1.msra.mxu0 0.0
    %1168 = vmatprep.subr.mxu0 0.0
    %1169 = vmatpush1.msra.mxu0 0.0
    %1170 = vmatprep.subr.mxu0 0.0
    %1171 = vmatpush1.msra.mxu0 0.0
    %1172 = vmatprep.subr.mxu0 0.0
    %1173 = vmatpush1.msra.mxu0 0.0
    %1174 = vmatprep.subr.mxu0 0.0
    %1175 = vmatpush1.msra.mxu0 0.0
    %1176 = vmatprep.subr.mxu0 0.0
    %1177 = vmatpush1.msra.mxu0 0.0
    %1178 = vmatprep.subr.mxu0 0.0
    %1179 = vmatpush1.msra.mxu0 0.0
    %1180 = vmatprep.subr.mxu0 0.0
    %1181 = vmatpush1.msra.mxu0 0.0
    %1182 = vmatprep.subr.mxu0 0.0
    %1183 = vmatpush1.msra.mxu0 0.0
    %1184 = vmatprep.subr.mxu0 0.0
    %1185 = vmatpush1.msra.mxu0 0.0
    %1186 = vmatprep.subr.mxu0 0.0
    %1187 = vmatpush1.msra.mxu0 0.0
    %1188 = vmatprep.subr.mxu0 0.0
    %1189 = vmatpush1.msra.mxu0 0.0
    %1190 = vmatprep.subr.mxu0 0.0
    %1191 = vmatpush1.msra.mxu0 0.0
    %1192 = vmatprep.subr.mxu0 0.0
    %1193 = vmatpush1.msra.mxu0 0.0
    %1194 = vmatprep.subr.mxu0 0.0
    %1195 = vmatpush1.msra.mxu0 0.0
    %1196 = vmatprep.subr.mxu0 0.0
    %1197 = vmatpush1.msra.mxu0 0.0
    %1198 = vmatprep.subr.mxu0 0.0
    %1199 = vmatpush1.msra.mxu0 0.0
    %1200 = vmatprep.subr.mxu0 0.0
    %1201 = vmatpush1.msra.mxu0 0.0
    %1202 = vmatprep.subr.mxu0 0.0
    %1203 = vmatpush1.msra.mxu0 0.0
    %1204 = vmatprep.subr.mxu0 0.0
    %1205 = vmatpush1.msra.mxu0 0.0
    %1206 = vmatprep.subr.mxu0 0.0
    %1207 = vmatpush1.msra.mxu0 0.0
    %1208 = vmatprep.subr.mxu0 0.0
    %1209 = vmatpush1.msra.mxu0 0.0
    %1210 = vmatprep.subr.mxu0 0.0
    %1211 = vmatpush1.msra.mxu0 0.0
    %1212 = vmatprep.subr.mxu0 0.0
    %1213 = vmatpush1.msra.mxu0 0.0
    %1214 = vmatprep.subr.mxu0 0.0
    %1215 = vmatpush1.msra.mxu0 0.0
    %1216 = vmatprep.subr.mxu0 0.0
    %1217 = vmatpush1.msra.mxu0 0.0
    %1218 = vmatprep.subr.mxu0 0.0
    %1219 = vmatpush1.msra.mxu0 0.0
    %1220 = vmatprep.subr.mxu0 0.0
    %1221 = vmatpush1.msra.mxu0 0.0
    %1222 = vmatprep.subr.mxu0 0.0
    %1223 = vmatpush1.msra.mxu0 0.0
    %1224 = vmatprep.mubr.f32.mxu0 0.0
    %1225 = vmatmul.mubr.f32.gmra.mrb[0].mxu0 %v105
    %v1226 = vpop.f32.mrb[0].mxu0
    %v1227 = vadd.f32 0.0, %v1226
    %v1228 = vpop.f32.mrb[0].mxu0
    %1229 = vmatprep.mubr.f32.mxu0 0.0
    %1230 = vmatmul.mubr.f32.gmra.mrb[0].mxu0 %v108
    %v1231 = vpop.f32.mrb[0].mxu0
    %v1232 = vadd.f32 0.0, %v1231
    %v1233 = vpop.f32.mrb[0].mxu0
    %1234 = vdwg.mxu0
    %1235 = vmatprep.subr.mxu0 0.0
    %1236 = vmatpush1.msra.mxu0 %v90
    %1237 = vmatprep.subr.mxu0 0.0
    %1238 = vmatpush1.msra.mxu0 %v91
    %1239 = vmatprep.subr.mxu0 0.0
    %1240 = vmatpush1.msra.mxu0 0.0
    %1241 = vmatprep.subr.mxu0 0.0
    %1242 = vmatpush1.msra.mxu0 0.0
    %1243 = vmatprep.subr.mxu0 0.0
    %1244 = vmatpush1.msra.mxu0 0.0
    %1245 = vmatprep.subr.mxu0 0.0
    %1246 = vmatpush1.msra.mxu0 0.0
    %1247 = vmatprep.subr.mxu0 0.0
    %1248 = vmatpush1.msra.mxu0 0.0
    %1249 = vmatprep.subr.mxu0 0.0
    %1250 = vmatpush1.msra.mxu0 0.0
    %1251 = vmatprep.subr.mxu0 0.0
    %1252 = vmatpush1.msra.mxu0 0.0
    %1253 = vmatprep.subr.mxu0 0.0
    %1254 = vmatpush1.msra.mxu0 0.0
    %1255 = vmatprep.subr.mxu0 0.0
    %1256 = vmatpush1.msra.mxu0 0.0
    %1257 = vmatprep.subr.mxu0 0.0
    %1258 = vmatpush1.msra.mxu0 0.0
    %1259 = vmatprep.subr.mxu0 0.0
    %1260 = vmatpush1.msra.mxu0 0.0
    %1261 = vmatprep.subr.mxu0 0.0
    %1262 = vmatpush1.msra.mxu0 0.0
    %1263 = vmatprep.subr.mxu0 0.0
    %1264 = vmatpush1.msra.mxu0 0.0
    %1265 = vmatprep.subr.mxu0 0.0
    %1266 = vmatpush1.msra.mxu0 0.0
    %1267 = vmatprep.subr.mxu0 0.0
    %1268 = vmatpush1.msra.mxu0 0.0
    %1269 = vmatprep.subr.mxu0 0.0
    %1270 = vmatpush1.msra.mxu0 0.0
    %1271 = vmatprep.subr.mxu0 0.0
    %1272 = vmatpush1.msra.mxu0 0.0
    %1273 = vmatprep.subr.mxu0 0.0
    %1274 = vmatpush1.msra.mxu0 0.0
    %1275 = vmatprep.subr.mxu0 0.0
    %1276 = vmatpush1.msra.mxu0 0.0
    %1277 = vmatprep.subr.mxu0 0.0
    %1278 = vmatpush1.msra.mxu0 0.0
    %1279 = vmatprep.subr.mxu0 0.0
    %1280 = vmatpush1.msra.mxu0 0.0
    %1281 = vmatprep.subr.mxu0 0.0
    %1282 = vmatpush1.msra.mxu0 0.0
    %1283 = vmatprep.subr.mxu0 0.0
    %1284 = vmatpush1.msra.mxu0 0.0
    %1285 = vmatprep.subr.mxu0 0.0
    %1286 = vmatpush1.msra.mxu0 0.0
    %1287 = vmatprep.subr.mxu0 0.0
    %1288 = vmatpush1.msra.mxu0 0.0
    %1289 = vmatprep.subr.mxu0 0.0
    %1290 = vmatpush1.msra.mxu0 0.0
    %1291 = vmatprep.subr.mxu0 0.0
    %1292 = vmatpush1.msra.mxu0 0.0
    %1293 = vmatprep.subr.mxu0 0.0
    %1294 = vmatpush1.msra.mxu0 0.0
    %1295 = vmatprep.subr.mxu0 0.0
    %1296 = vmatpush1.msra.mxu0 0.0
    %1297 = vmatprep.subr.mxu0 0.0
    %1298 = vmatpush1.msra.mxu0 0.0
    %1299 = vmatprep.mubr.f32.mxu0 0.0
    %1300 = vmatmul.mubr.f32.gmra.mrb[0].mxu0 %v105
    %v1301 = vpop.f32.mrb[0].mxu0
    %v1302 = vadd.f32 0.0, %v1301
    %v1303 = vpop.f32.mrb[0].mxu0
    %1304 = vmatprep.mubr.f32.mxu0 0.0
    %1305 = vmatmul.mubr.f32.gmra.mrb[0].mxu0 %v108
    %v1306 = vpop.f32.mrb[0].mxu0
    %v1307 = vadd.f32 0.0, %v1306
    %v1308 = vpop.f32.mrb[0].mxu0
    %1309 = vdwg.mxu0
    %v1311 = vsel %vm103, %v60, 0
    %v1314 = vsel %vm103, %v61, 0
    %1316 = vmatprep.subr.mxu0 0.0
    %1317 = vmatpush1.msra.mxu0 %v101
    %1318 = vmatprep.subr.mxu0 0.0
    %1319 = vmatpush1.msra.mxu0 %v102
    %1320 = vmatprep.subr.mxu0 0.0
    %1321 = vmatpush1.msra.mxu0 0.0
    %1322 = vmatprep.subr.mxu0 0.0
    %1323 = vmatpush1.msra.mxu0 0.0
    %1324 = vmatprep.subr.mxu0 0.0
    %1325 = vmatpush1.msra.mxu0 0.0
    %1326 = vmatprep.subr.mxu0 0.0
    %1327 = vmatpush1.msra.mxu0 0.0
    %1328 = vmatprep.subr.mxu0 0.0
    %1329 = vmatpush1.msra.mxu0 0.0
    %1330 = vmatprep.subr.mxu0 0.0
    %1331 = vmatpush1.msra.mxu0 0.0
    %1332 = vmatprep.subr.mxu0 0.0
    %1333 = vmatpush1.msra.mxu0 0.0
    %1334 = vmatprep.subr.mxu0 0.0
    %1335 = vmatpush1.msra.mxu0 0.0
    %1336 = vmatprep.subr.mxu0 0.0
    %1337 = vmatpush1.msra.mxu0 0.0
    %1338 = vmatprep.subr.mxu0 0.0
    %1339 = vmatpush1.msra.mxu0 0.0
    %1340 = vmatprep.subr.mxu0 0.0
    %1341 = vmatpush1.msra.mxu0 0.0
    %1342 = vmatprep.subr.mxu0 0.0
    %1343 = vmatpush1.msra.mxu0 0.0
    %1344 = vmatprep.subr.mxu0 0.0
    %1345 = vmatpush1.msra.mxu0 0.0
    %1346 = vmatprep.subr.mxu0 0.0
    %1347 = vmatpush1.msra.mxu0 0.0
    %1348 = vmatprep.subr.mxu0 0.0
    %1349 = vmatpush1.msra.mxu0 0.0
    %1350 = vmatprep.subr.mxu0 0.0
    %1351 = vmatpush1.msra.mxu0 0.0
    %1352 = vmatprep.subr.mxu0 0.0
    %1353 = vmatpush1.msra.mxu0 0.0
    %1354 = vmatprep.subr.mxu0 0.0
    %1355 = vmatpush1.msra.mxu0 0.0
    %1356 = vmatprep.subr.mxu0 0.0
    %1357 = vmatpush1.msra.mxu0 0.0
    %1358 = vmatprep.subr.mxu0 0.0
    %1359 = vmatpush1.msra.mxu0 0.0
    %1360 = vmatprep.subr.mxu0 0.0
    %1361 = vmatpush1.msra.mxu0 0.0
    %1362 = vmatprep.subr.mxu0 0.0
    %1363 = vmatpush1.msra.mxu0 0.0
    %1364 = vmatprep.subr.mxu0 0.0
    %1365 = vmatpush1.msra.mxu0 0.0
    %1366 = vmatprep.subr.mxu0 0.0
    %1367 = vmatpush1.msra.mxu0 0.0
    %1368 = vmatprep.subr.mxu0 0.0
    %1369 = vmatpush1.msra.mxu0 0.0
    %1370 = vmatprep.subr.mxu0 0.0
    %1371 = vmatpush1.msra.mxu0 0.0
    %1372 = vmatprep.subr.mxu0 0.0
    %1373 = vmatpush1.msra.mxu0 0.0
    %1374 = vmatprep.subr.mxu0 0.0
    %1375 = vmatpush1.msra.mxu0 0.0
    %1376 = vmatprep.subr.mxu0 0.0
    %1377 = vmatpush1.msra.mxu0 0.0
    %1378 = vmatprep.subr.mxu0 0.0
    %1379 = vmatpush1.msra.mxu0 0.0
    %1380 = vmatprep.mubr.f32.mxu0 0.0
    %1381 = vmatmul.mubr.f32.gmra.mrb[0].mxu0 %v1311
    %v1382 = vpop.f32.mrb[0].mxu0
    %v1383 = vadd.f32 0.0, %v1382
    %v1384 = vpop.f32.mrb[0].mxu0
    %1385 = vmatprep.mubr.f32.mxu0 0.0
    %1386 = vmatmul.mubr.f32.gmra.mrb[0].mxu0 %v1314
    %v1387 = vpop.f32.mrb[0].mxu0
    %v1388 = vadd.f32 0.0, %v1387
    %v1389 = vpop.f32.mrb[0].mxu0
    %1390 = vdwg.mxu0
    %v1392 = vsel %vm103, %v62, 0
    %v1395 = vsel %vm103, %v63, 0
    %1397 = vmatprep.subr.mxu0 0.0
    %1398 = vmatpush1.msra.mxu0 %v101
    %1399 = vmatprep.subr.mxu0 0.0
    %1400 = vmatpush1.msra.mxu0 %v102
    %1401 = vmatprep.subr.mxu0 0.0
    %1402 = vmatpush1.msra.mxu0 0.0
    %1403 = vmatprep.subr.mxu0 0.0
    %1404 = vmatpush1.msra.mxu0 0.0
    %1405 = vmatprep.subr.mxu0 0.0
    %1406 = vmatpush1.msra.mxu0 0.0
    %1407 = vmatprep.subr.mxu0 0.0
    %1408 = vmatpush1.msra.mxu0 0.0
    %1409 = vmatprep.subr.mxu0 0.0
    %1410 = vmatpush1.msra.mxu0 0.0
    %1411 = vmatprep.subr.mxu0 0.0
    %1412 = vmatpush1.msra.mxu0 0.0
    %1413 = vmatprep.subr.mxu0 0.0
    %1414 = vmatpush1.msra.mxu0 0.0
    %1415 = vmatprep.subr.mxu0 0.0
    %1416 = vmatpush1.msra.mxu0 0.0
    %1417 = vmatprep.subr.mxu0 0.0
    %1418 = vmatpush1.msra.mxu0 0.0
    %1419 = vmatprep.subr.mxu0 0.0
    %1420 = vmatpush1.msra.mxu0 0.0
    %1421 = vmatprep.subr.mxu0 0.0
    %1422 = vmatpush1.msra.mxu0 0.0
    %1423 = vmatprep.subr.mxu0 0.0
    %1424 = vmatpush1.msra.mxu0 0.0
    %1425 = vmatprep.subr.mxu0 0.0
    %1426 = vmatpush1.msra.mxu0 0.0
    %1427 = vmatprep.subr.mxu0 0.0
    %1428 = vmatpush1.msra.mxu0 0.0
    %1429 = vmatprep.subr.mxu0 0.0
    %1430 = vmatpush1.msra.mxu0 0.0
    %1431 = vmatprep.subr.mxu0 0.0
    %1432 = vmatpush1.msra.mxu0 0.0
    %1433 = vmatprep.subr.mxu0 0.0
    %1434 = vmatpush1.msra.mxu0 0.0
    %1435 = vmatprep.subr.mxu0 0.0
    %1436 = vmatpush1.msra.mxu0 0.0
    %1437 = vmatprep.subr.mxu0 0.0
    %1438 = vmatpush1.msra.mxu0 0.0
    %1439 = vmatprep.subr.mxu0 0.0
    %1440 = vmatpush1.msra.mxu0 0.0
    %1441 = vmatprep.subr.mxu0 0.0
    %1442 = vmatpush1.msra.mxu0 0.0
    %1443 = vmatprep.subr.mxu0 0.0
    %1444 = vmatpush1.msra.mxu0 0.0
    %1445 = vmatprep.subr.mxu0 0.0
    %1446 = vmatpush1.msra.mxu0 0.0
    %1447 = vmatprep.subr.mxu0 0.0
    %1448 = vmatpush1.msra.mxu0 0.0
    %1449 = vmatprep.subr.mxu0 0.0
    %1450 = vmatpush1.msra.mxu0 0.0
    %1451 = vmatprep.subr.mxu0 0.0
    %1452 = vmatpush1.msra.mxu0 0.0
    %1453 = vmatprep.subr.mxu0 0.0
    %1454 = vmatpush1.msra.mxu0 0.0
    %1455 = vmatprep.subr.mxu0 0.0
    %1456 = vmatpush1.msra.mxu0 0.0
    %1457 = vmatprep.subr.mxu0 0.0
    %1458 = vmatpush1.msra.mxu0 0.0
    %1459 = vmatprep.subr.mxu0 0.0
    %1460 = vmatpush1.msra.mxu0 0.0
    %1461 = vmatprep.mubr.f32.mxu0 0.0
    %1462 = vmatmul.mubr.f32.gmra.mrb[0].mxu0 %v1392
    %v1463 = vpop.f32.mrb[0].mxu0
    %v1464 = vadd.f32 0.0, %v1463
    %v1465 = vpop.f32.mrb[0].mxu0
    %1466 = vmatprep.mubr.f32.mxu0 0.0
    %1467 = vmatmul.mubr.f32.gmra.mrb[0].mxu0 %v1395
    %v1468 = vpop.f32.mrb[0].mxu0
    %v1469 = vadd.f32 0.0, %v1468
    %v1470 = vpop.f32.mrb[0].mxu0
    %1471 = vdwg.mxu0
    %v1473 = vsel %vm103, %v64, 0
    %v1476 = vsel %vm103, %v65, 0
    %1478 = vmatprep.subr.mxu0 0.0
    %1479 = vmatpush1.msra.mxu0 %v101
    %1480 = vmatprep.subr.mxu0 0.0
    %1481 = vmatpush1.msra.mxu0 %v102
    %1482 = vmatprep.subr.mxu0 0.0
    %1483 = vmatpush1.msra.mxu0 0.0
    %1484 = vmatprep.subr.mxu0 0.0
    %1485 = vmatpush1.msra.mxu0 0.0
    %1486 = vmatprep.subr.mxu0 0.0
    %1487 = vmatpush1.msra.mxu0 0.0
    %1488 = vmatprep.subr.mxu0 0.0
    %1489 = vmatpush1.msra.mxu0 0.0
    %1490 = vmatprep.subr.mxu0 0.0
    %1491 = vmatpush1.msra.mxu0 0.0
    %1492 = vmatprep.subr.mxu0 0.0
    %1493 = vmatpush1.msra.mxu0 0.0
    %1494 = vmatprep.subr.mxu0 0.0
    %1495 = vmatpush1.msra.mxu0 0.0
    %1496 = vmatprep.subr.mxu0 0.0
    %1497 = vmatpush1.msra.mxu0 0.0
    %1498 = vmatprep.subr.mxu0 0.0
    %1499 = vmatpush1.msra.mxu0 0.0
    %1500 = vmatprep.subr.mxu0 0.0
    %1501 = vmatpush1.msra.mxu0 0.0
    %1502 = vmatprep.subr.mxu0 0.0
    %1503 = vmatpush1.msra.mxu0 0.0
    %1504 = vmatprep.subr.mxu0 0.0
    %1505 = vmatpush1.msra.mxu0 0.0
    %1506 = vmatprep.subr.mxu0 0.0
    %1507 = vmatpush1.msra.mxu0 0.0
    %1508 = vmatprep.subr.mxu0 0.0
    %1509 = vmatpush1.msra.mxu0 0.0
    %1510 = vmatprep.subr.mxu0 0.0
    %1511 = vmatpush1.msra.mxu0 0.0
    %1512 = vmatprep.subr.mxu0 0.0
    %1513 = vmatpush1.msra.mxu0 0.0
    %1514 = vmatprep.subr.mxu0 0.0
    %1515 = vmatpush1.msra.mxu0 0.0
    %1516 = vmatprep.subr.mxu0 0.0
    %1517 = vmatpush1.msra.mxu0 0.0
    %1518 = vmatprep.subr.mxu0 0.0
    %1519 = vmatpush1.msra.mxu0 0.0
    %1520 = vmatprep.subr.mxu0 0.0
    %1521 = vmatpush1.msra.mxu0 0.0
    %1522 = vmatprep.subr.mxu0 0.0
    %1523 = vmatpush1.msra.mxu0 0.0
    %1524 = vmatprep.subr.mxu0 0.0
    %1525 = vmatpush1.msra.mxu0 0.0
    %1526 = vmatprep.subr.mxu0 0.0
    %1527 = vmatpush1.msra.mxu0 0.0
    %1528 = vmatprep.subr.mxu0 0.0
    %1529 = vmatpush1.msra.mxu0 0.0
    %1530 = vmatprep.subr.mxu0 0.0
    %1531 = vmatpush1.msra.mxu0 0.0
    %1532 = vmatprep.subr.mxu0 0.0
    %1533 = vmatpush1.msra.mxu0 0.0
    %1534 = vmatprep.subr.mxu0 0.0
    %1535 = vmatpush1.msra.mxu0 0.0
    %1536 = vmatprep.subr.mxu0 0.0
    %1537 = vmatpush1.msra.mxu0 0.0
    %1538 = vmatprep.subr.mxu0 0.0
    %1539 = vmatpush1.msra.mxu0 0.0
    %1540 = vmatprep.subr.mxu0 0.0
    %1541 = vmatpush1.msra.mxu0 0.0
    %1542 = vmatprep.mubr.f32.mxu0 0.0
    %1543 = vmatmul.mubr.f32.gmra.mrb[0].mxu0 %v1473
    %v1544 = vpop.f32.mrb[0].mxu0
    %v1545 = vadd.f32 0.0, %v1544
    %v1546 = vpop.f32.mrb[0].mxu0
    %1547 = vmatprep.mubr.f32.mxu0 0.0
    %1548 = vmatmul.mubr.f32.gmra.mrb[0].mxu0 %v1476
    %v1549 = vpop.f32.mrb[0].mxu0
    %v1550 = vadd.f32 0.0, %v1549
    %v1551 = vpop.f32.mrb[0].mxu0
    %1552 = vdwg.mxu0
    %v1554 = vsel %vm103, %v66, 0
    %v1557 = vsel %vm103, %v67, 0
    %1559 = vmatprep.subr.mxu0 0.0
    %1560 = vmatpush1.msra.mxu0 %v101
    %1561 = vmatprep.subr.mxu0 0.0
    %1562 = vmatpush1.msra.mxu0 %v102
    %1563 = vmatprep.subr.mxu0 0.0
    %1564 = vmatpush1.msra.mxu0 0.0
    %1565 = vmatprep.subr.mxu0 0.0
    %1566 = vmatpush1.msra.mxu0 0.0
    %1567 = vmatprep.subr.mxu0 0.0
    %1568 = vmatpush1.msra.mxu0 0.0
    %1569 = vmatprep.subr.mxu0 0.0
    %1570 = vmatpush1.msra.mxu0 0.0
    %1571 = vmatprep.subr.mxu0 0.0
    %1572 = vmatpush1.msra.mxu0 0.0
    %1573 = vmatprep.subr.mxu0 0.0
    %1574 = vmatpush1.msra.mxu0 0.0
    %1575 = vmatprep.subr.mxu0 0.0
    %1576 = vmatpush1.msra.mxu0 0.0
    %1577 = vmatprep.subr.mxu0 0.0
    %1578 = vmatpush1.msra.mxu0 0.0
    %1579 = vmatprep.subr.mxu0 0.0
    %1580 = vmatpush1.msra.mxu0 0.0
    %1581 = vmatprep.subr.mxu0 0.0
    %1582 = vmatpush1.msra.mxu0 0.0
    %1583 = vmatprep.subr.mxu0 0.0
    %1584 = vmatpush1.msra.mxu0 0.0
    %1585 = vmatprep.subr.mxu0 0.0
    %1586 = vmatpush1.msra.mxu0 0.0
    %1587 = vmatprep.subr.mxu0 0.0
    %1588 = vmatpush1.msra.mxu0 0.0
    %1589 = vmatprep.subr.mxu0 0.0
    %1590 = vmatpush1.msra.mxu0 0.0
    %1591 = vmatprep.subr.mxu0 0.0
    %1592 = vmatpush1.msra.mxu0 0.0
    %1593 = vmatprep.subr.mxu0 0.0
    %1594 = vmatpush1.msra.mxu0 0.0
    %1595 = vmatprep.subr.mxu0 0.0
    %1596 = vmatpush1.msra.mxu0 0.0
    %1597 = vmatprep.subr.mxu0 0.0
    %1598 = vmatpush1.msra.mxu0 0.0
    %1599 = vmatprep.subr.mxu0 0.0
    %1600 = vmatpush1.msra.mxu0 0.0
    %1601 = vmatprep.subr.mxu0 0.0
    %1602 = vmatpush1.msra.mxu0 0.0
    %1603 = vmatprep.subr.mxu0 0.0
    %1604 = vmatpush1.msra.mxu0 0.0
    %1605 = vmatprep.subr.mxu0 0.0
    %1606 = vmatpush1.msra.mxu0 0.0
    %1607 = vmatprep.subr.mxu0 0.0
    %1608 = vmatpush1.msra.mxu0 0.0
    %1609 = vmatprep.subr.mxu0 0.0
    %1610 = vmatpush1.msra.mxu0 0.0
    %1611 = vmatprep.subr.mxu0 0.0
    %1612 = vmatpush1.msra.mxu0 0.0
    %1613 = vmatprep.subr.mxu0 0.0
    %1614 = vmatpush1.msra.mxu0 0.0
    %1615 = vmatprep.subr.mxu0 0.0
    %1616 = vmatpush1.msra.mxu0 0.0
    %1617 = vmatprep.subr.mxu0 0.0
    %1618 = vmatpush1.msra.mxu0 0.0
    %1619 = vmatprep.subr.mxu0 0.0
    %1620 = vmatpush1.msra.mxu0 0.0
    %1621 = vmatprep.subr.mxu0 0.0
    %1622 = vmatpush1.msra.mxu0 0.0
    %1623 = vmatprep.mubr.f32.mxu0 0.0
    %1624 = vmatmul.mubr.f32.gmra.mrb[0].mxu0 %v1554
    %v1625 = vpop.f32.mrb[0].mxu0
    %v1626 = vadd.f32 0.0, %v1625
    %v1627 = vpop.f32.mrb[0].mxu0
    %1628 = vmatprep.mubr.f32.mxu0 0.0
    %1629 = vmatmul.mubr.f32.gmra.mrb[0].mxu0 %v1557
    %v1630 = vpop.f32.mrb[0].mxu0
    %v1631 = vadd.f32 0.0, %v1630
    %v1632 = vpop.f32.mrb[0].mxu0
    %1633 = vdwg.mxu0
    %v1635 = vsel %vm103, %v68, 0
    %v1638 = vsel %vm103, %v69, 0
    %1640 = vmatprep.subr.mxu0 0.0
    %1641 = vmatpush1.msra.mxu0 %v101
    %1642 = vmatprep.subr.mxu0 0.0
    %1643 = vmatpush1.msra.mxu0 %v102
    %1644 = vmatprep.subr.mxu0 0.0
    %1645 = vmatpush1.msra.mxu0 0.0
    %1646 = vmatprep.subr.mxu0 0.0
    %1647 = vmatpush1.msra.mxu0 0.0
    %1648 = vmatprep.subr.mxu0 0.0
    %1649 = vmatpush1.msra.mxu0 0.0
    %1650 = vmatprep.subr.mxu0 0.0
    %1651 = vmatpush1.msra.mxu0 0.0
    %1652 = vmatprep.subr.mxu0 0.0
    %1653 = vmatpush1.msra.mxu0 0.0
    %1654 = vmatprep.subr.mxu0 0.0
    %1655 = vmatpush1.msra.mxu0 0.0
    %1656 = vmatprep.subr.mxu0 0.0
    %1657 = vmatpush1.msra.mxu0 0.0
    %1658 = vmatprep.subr.mxu0 0.0
    %1659 = vmatpush1.msra.mxu0 0.0
    %1660 = vmatprep.subr.mxu0 0.0
    %1661 = vmatpush1.msra.mxu0 0.0
    %1662 = vmatprep.subr.mxu0 0.0
    %1663 = vmatpush1.msra.mxu0 0.0
    %1664 = vmatprep.subr.mxu0 0.0
    %1665 = vmatpush1.msra.mxu0 0.0
    %1666 = vmatprep.subr.mxu0 0.0
    %1667 = vmatpush1.msra.mxu0 0.0
    %1668 = vmatprep.subr.mxu0 0.0
    %1669 = vmatpush1.msra.mxu0 0.0
    %1670 = vmatprep.subr.mxu0 0.0
    %1671 = vmatpush1.msra.mxu0 0.0
    %1672 = vmatprep.subr.mxu0 0.0
    %1673 = vmatpush1.msra.mxu0 0.0
    %1674 = vmatprep.subr.mxu0 0.0
    %1675 = vmatpush1.msra.mxu0 0.0
    %1676 = vmatprep.subr.mxu0 0.0
    %1677 = vmatpush1.msra.mxu0 0.0
    %1678 = vmatprep.subr.mxu0 0.0
    %1679 = vmatpush1.msra.mxu0 0.0
    %1680 = vmatprep.subr.mxu0 0.0
    %1681 = vmatpush1.msra.mxu0 0.0
    %1682 = vmatprep.subr.mxu0 0.0
    %1683 = vmatpush1.msra.mxu0 0.0
    %1684 = vmatprep.subr.mxu0 0.0
    %1685 = vmatpush1.msra.mxu0 0.0
    %1686 = vmatprep.subr.mxu0 0.0
    %1687 = vmatpush1.msra.mxu0 0.0
    %1688 = vmatprep.subr.mxu0 0.0
    %1689 = vmatpush1.msra.mxu0 0.0
    %1690 = vmatprep.subr.mxu0 0.0
    %1691 = vmatpush1.msra.mxu0 0.0
    %1692 = vmatprep.subr.mxu0 0.0
    %1693 = vmatpush1.msra.mxu0 0.0
    %1694 = vmatprep.subr.mxu0 0.0
    %1695 = vmatpush1.msra.mxu0 0.0
    %1696 = vmatprep.subr.mxu0 0.0
    %1697 = vmatpush1.msra.mxu0 0.0
    %1698 = vmatprep.subr.mxu0 0.0
    %1699 = vmatpush1.msra.mxu0 0.0
    %1700 = vmatprep.subr.mxu0 0.0
    %1701 = vmatpush1.msra.mxu0 0.0
    %1702 = vmatprep.subr.mxu0 0.0
    %1703 = vmatpush1.msra.mxu0 0.0
    %1704 = vmatprep.mubr.f32.mxu0 0.0
    %1705 = vmatmul.mubr.f32.gmra.mrb[0].mxu0 %v1635
    %v1706 = vpop.f32.mrb[0].mxu0
    %v1707 = vadd.f32 0.0, %v1706
    %v1708 = vpop.f32.mrb[0].mxu0
    %1709 = vmatprep.mubr.f32.mxu0 0.0
    %1710 = vmatmul.mubr.f32.gmra.mrb[0].mxu0 %v1638
    %v1711 = vpop.f32.mrb[0].mxu0
    %v1712 = vadd.f32 0.0, %v1711
    %v1713 = vpop.f32.mrb[0].mxu0
    %1714 = vdwg.mxu0
    %v1716 = vsel %vm103, %v70, 0
    %v1719 = vsel %vm103, %v71, 0
    %1721 = vmatprep.subr.mxu0 0.0
    %1722 = vmatpush1.msra.mxu0 %v101
    %1723 = vmatprep.subr.mxu0 0.0
    %1724 = vmatpush1.msra.mxu0 %v102
    %1725 = vmatprep.subr.mxu0 0.0
    %1726 = vmatpush1.msra.mxu0 0.0
    %1727 = vmatprep.subr.mxu0 0.0
    %1728 = vmatpush1.msra.mxu0 0.0
    %1729 = vmatprep.subr.mxu0 0.0
    %1730 = vmatpush1.msra.mxu0 0.0
    %1731 = vmatprep.subr.mxu0 0.0
    %1732 = vmatpush1.msra.mxu0 0.0
    %1733 = vmatprep.subr.mxu0 0.0
    %1734 = vmatpush1.msra.mxu0 0.0
    %1735 = vmatprep.subr.mxu0 0.0
    %1736 = vmatpush1.msra.mxu0 0.0
    %1737 = vmatprep.subr.mxu0 0.0
    %1738 = vmatpush1.msra.mxu0 0.0
    %1739 = vmatprep.subr.mxu0 0.0
    %1740 = vmatpush1.msra.mxu0 0.0
    %1741 = vmatprep.subr.mxu0 0.0
    %1742 = vmatpush1.msra.mxu0 0.0
    %1743 = vmatprep.subr.mxu0 0.0
    %1744 = vmatpush1.msra.mxu0 0.0
    %1745 = vmatprep.subr.mxu0 0.0
    %1746 = vmatpush1.msra.mxu0 0.0
    %1747 = vmatprep.subr.mxu0 0.0
    %1748 = vmatpush1.msra.mxu0 0.0
    %1749 = vmatprep.subr.mxu0 0.0
    %1750 = vmatpush1.msra.mxu0 0.0
    %1751 = vmatprep.subr.mxu0 0.0
    %1752 = vmatpush1.msra.mxu0 0.0
    %1753 = vmatprep.subr.mxu0 0.0
    %1754 = vmatpush1.msra.mxu0 0.0
    %1755 = vmatprep.subr.mxu0 0.0
    %1756 = vmatpush1.msra.mxu0 0.0
    %1757 = vmatprep.subr.mxu0 0.0
    %1758 = vmatpush1.msra.mxu0 0.0
    %1759 = vmatprep.subr.mxu0 0.0
    %1760 = vmatpush1.msra.mxu0 0.0
    %1761 = vmatprep.subr.mxu0 0.0
    %1762 = vmatpush1.msra.mxu0 0.0
    %1763 = vmatprep.subr.mxu0 0.0
    %1764 = vmatpush1.msra.mxu0 0.0
    %1765 = vmatprep.subr.mxu0 0.0
    %1766 = vmatpush1.msra.mxu0 0.0
    %1767 = vmatprep.subr.mxu0 0.0
    %1768 = vmatpush1.msra.mxu0 0.0
    %1769 = vmatprep.subr.mxu0 0.0
    %1770 = vmatpush1.msra.mxu0 0.0
    %1771 = vmatprep.subr.mxu0 0.0
    %1772 = vmatpush1.msra.mxu0 0.0
    %1773 = vmatprep.subr.mxu0 0.0
    %1774 = vmatpush1.msra.mxu0 0.0
    %1775 = vmatprep.subr.mxu0 0.0
    %1776 = vmatpush1.msra.mxu0 0.0
    %1777 = vmatprep.subr.mxu0 0.0
    %1778 = vmatpush1.msra.mxu0 0.0
    %1779 = vmatprep.subr.mxu0 0.0
    %1780 = vmatpush1.msra.mxu0 0.0
    %1781 = vmatprep.subr.mxu0 0.0
    %1782 = vmatpush1.msra.mxu0 0.0
    %1783 = vmatprep.subr.mxu0 0.0
    %1784 = vmatpush1.msra.mxu0 0.0
    %1785 = vmatprep.mubr.f32.mxu0 0.0
    %1786 = vmatmul.mubr.f32.gmra.mrb[0].mxu0 %v1716
    %v1787 = vpop.f32.mrb[0].mxu0
    %v1788 = vadd.f32 0.0, %v1787
    %v1789 = vpop.f32.mrb[0].mxu0
    %1790 = vmatprep.mubr.f32.mxu0 0.0
    %1791 = vmatmul.mubr.f32.gmra.mrb[0].mxu0 %v1719
    %v1792 = vpop.f32.mrb[0].mxu0
    %v1793 = vadd.f32 0.0, %v1792
    %v1794 = vpop.f32.mrb[0].mxu0
    %1795 = vdwg.mxu0
    %v1797 = vsel %vm103, %v72, 0
    %v1800 = vsel %vm103, %v73, 0
    %1802 = vmatprep.subr.mxu0 0.0
    %1803 = vmatpush1.msra.mxu0 %v101
    %1804 = vmatprep.subr.mxu0 0.0
    %1805 = vmatpush1.msra.mxu0 %v102
    %1806 = vmatprep.subr.mxu0 0.0
    %1807 = vmatpush1.msra.mxu0 0.0
    %1808 = vmatprep.subr.mxu0 0.0
    %1809 = vmatpush1.msra.mxu0 0.0
    %1810 = vmatprep.subr.mxu0 0.0
    %1811 = vmatpush1.msra.mxu0 0.0
    %1812 = vmatprep.subr.mxu0 0.0
    %1813 = vmatpush1.msra.mxu0 0.0
    %1814 = vmatprep.subr.mxu0 0.0
    %1815 = vmatpush1.msra.mxu0 0.0
    %1816 = vmatprep.subr.mxu0 0.0
    %1817 = vmatpush1.msra.mxu0 0.0
    %1818 = vmatprep.subr.mxu0 0.0
    %1819 = vmatpush1.msra.mxu0 0.0
    %1820 = vmatprep.subr.mxu0 0.0
    %1821 = vmatpush1.msra.mxu0 0.0
    %1822 = vmatprep.subr.mxu0 0.0
    %1823 = vmatpush1.msra.mxu0 0.0
    %1824 = vmatprep.subr.mxu0 0.0
    %1825 = vmatpush1.msra.mxu0 0.0
    %1826 = vmatprep.subr.mxu0 0.0
    %1827 = vmatpush1.msra.mxu0 0.0
    %1828 = vmatprep.subr.mxu0 0.0
    %1829 = vmatpush1.msra.mxu0 0.0
    %1830 = vmatprep.subr.mxu0 0.0
    %1831 = vmatpush1.msra.mxu0 0.0
    %1832 = vmatprep.subr.mxu0 0.0
    %1833 = vmatpush1.msra.mxu0 0.0
    %1834 = vmatprep.subr.mxu0 0.0
    %1835 = vmatpush1.msra.mxu0 0.0
    %1836 = vmatprep.subr.mxu0 0.0
    %1837 = vmatpush1.msra.mxu0 0.0
    %1838 = vmatprep.subr.mxu0 0.0
    %1839 = vmatpush1.msra.mxu0 0.0
    %1840 = vmatprep.subr.mxu0 0.0
    %1841 = vmatpush1.msra.mxu0 0.0
    %1842 = vmatprep.subr.mxu0 0.0
    %1843 = vmatpush1.msra.mxu0 0.0
    %1844 = vmatprep.subr.mxu0 0.0
    %1845 = vmatpush1.msra.mxu0 0.0
    %1846 = vmatprep.subr.mxu0 0.0
    %1847 = vmatpush1.msra.mxu0 0.0
    %1848 = vmatprep.subr.mxu0 0.0
    %1849 = vmatpush1.msra.mxu0 0.0
    %1850 = vmatprep.subr.mxu0 0.0
    %1851 = vmatpush1.msra.mxu0 0.0
    %1852 = vmatprep.subr.mxu0 0.0
    %1853 = vmatpush1.msra.mxu0 0.0
    %1854 = vmatprep.subr.mxu0 0.0
    %1855 = vmatpush1.msra.mxu0 0.0
    %1856 = vmatprep.subr.mxu0 0.0
    %1857 = vmatpush1.msra.mxu0 0.0
    %1858 = vmatprep.subr.mxu0 0.0
    %1859 = vmatpush1.msra.mxu0 0.0
    %1860 = vmatprep.subr.mxu0 0.0
    %1861 = vmatpush1.msra.mxu0 0.0
    %1862 = vmatprep.subr.mxu0 0.0
    %1863 = vmatpush1.msra.mxu0 0.0
    %1864 = vmatprep.subr.mxu0 0.0
    %1865 = vmatpush1.msra.mxu0 0.0
    %1866 = vmatprep.mubr.f32.mxu0 0.0
    %1867 = vmatmul.mubr.f32.gmra.mrb[0].mxu0 %v1797
    %v1868 = vpop.f32.mrb[0].mxu0
    %v1869 = vadd.f32 0.0, %v1868
    %v1870 = vpop.f32.mrb[0].mxu0
    %1871 = vmatprep.mubr.f32.mxu0 0.0
    %1872 = vmatmul.mubr.f32.gmra.mrb[0].mxu0 %v1800
    %v1873 = vpop.f32.mrb[0].mxu0
    %v1874 = vadd.f32 0.0, %v1873
    %v1875 = vpop.f32.mrb[0].mxu0
    %1876 = vdwg.mxu0
    %v1878 = vsel %vm103, %v74, 0
    %v1881 = vsel %vm103, %v75, 0
    %1883 = vmatprep.subr.mxu0 0.0
    %1884 = vmatpush1.msra.mxu0 %v101
    %1885 = vmatprep.subr.mxu0 0.0
    %1886 = vmatpush1.msra.mxu0 %v102
    %1887 = vmatprep.subr.mxu0 0.0
    %1888 = vmatpush1.msra.mxu0 0.0
    %1889 = vmatprep.subr.mxu0 0.0
    %1890 = vmatpush1.msra.mxu0 0.0
    %1891 = vmatprep.subr.mxu0 0.0
    %1892 = vmatpush1.msra.mxu0 0.0
    %1893 = vmatprep.subr.mxu0 0.0
    %1894 = vmatpush1.msra.mxu0 0.0
    %1895 = vmatprep.subr.mxu0 0.0
    %1896 = vmatpush1.msra.mxu0 0.0
    %1897 = vmatprep.subr.mxu0 0.0
    %1898 = vmatpush1.msra.mxu0 0.0
    %1899 = vmatprep.subr.mxu0 0.0
    %1900 = vmatpush1.msra.mxu0 0.0
    %1901 = vmatprep.subr.mxu0 0.0
    %1902 = vmatpush1.msra.mxu0 0.0
    %1903 = vmatprep.subr.mxu0 0.0
    %1904 = vmatpush1.msra.mxu0 0.0
    %1905 = vmatprep.subr.mxu0 0.0
    %1906 = vmatpush1.msra.mxu0 0.0
    %1907 = vmatprep.subr.mxu0 0.0
    %1908 = vmatpush1.msra.mxu0 0.0
    %1909 = vmatprep.subr.mxu0 0.0
    %1910 = vmatpush1.msra.mxu0 0.0
    %1911 = vmatprep.subr.mxu0 0.0
    %1912 = vmatpush1.msra.mxu0 0.0
    %1913 = vmatprep.subr.mxu0 0.0
    %1914 = vmatpush1.msra.mxu0 0.0
    %1915 = vmatprep.subr.mxu0 0.0
    %1916 = vmatpush1.msra.mxu0 0.0
    %1917 = vmatprep.subr.mxu0 0.0
    %1918 = vmatpush1.msra.mxu0 0.0
    %1919 = vmatprep.subr.mxu0 0.0
    %1920 = vmatpush1.msra.mxu0 0.0
    %1921 = vmatprep.subr.mxu0 0.0
    %1922 = vmatpush1.msra.mxu0 0.0
    %1923 = vmatprep.subr.mxu0 0.0
    %1924 = vmatpush1.msra.mxu0 0.0
    %1925 = vmatprep.subr.mxu0 0.0
    %1926 = vmatpush1.msra.mxu0 0.0
    %1927 = vmatprep.subr.mxu0 0.0
    %1928 = vmatpush1.msra.mxu0 0.0
    %1929 = vmatprep.subr.mxu0 0.0
    %1930 = vmatpush1.msra.mxu0 0.0
    %1931 = vmatprep.subr.mxu0 0.0
    %1932 = vmatpush1.msra.mxu0 0.0
    %1933 = vmatprep.subr.mxu0 0.0
    %1934 = vmatpush1.msra.mxu0 0.0
    %1935 = vmatprep.subr.mxu0 0.0
    %1936 = vmatpush1.msra.mxu0 0.0
    %1937 = vmatprep.subr.mxu0 0.0
    %1938 = vmatpush1.msra.mxu0 0.0
    %1939 = vmatprep.subr.mxu0 0.0
    %1940 = vmatpush1.msra.mxu0 0.0
    %1941 = vmatprep.subr.mxu0 0.0
    %1942 = vmatpush1.msra.mxu0 0.0
    %1943 = vmatprep.subr.mxu0 0.0
    %1944 = vmatpush1.msra.mxu0 0.0
    %1945 = vmatprep.subr.mxu0 0.0
    %1946 = vmatpush1.msra.mxu0 0.0
    %1947 = vmatprep.mubr.f32.mxu0 0.0
    %1948 = vmatmul.mubr.f32.gmra.mrb[0].mxu0 %v1878
    %v1949 = vpop.f32.mrb[0].mxu0
    %v1950 = vadd.f32 0.0, %v1949
    %v1951 = vpop.f32.mrb[0].mxu0
    %1952 = vmatprep.mubr.f32.mxu0 0.0
    %1953 = vmatmul.mubr.f32.gmra.mrb[0].mxu0 %v1881
    %v1954 = vpop.f32.mrb[0].mxu0
    %v1955 = vadd.f32 0.0, %v1954
    %v1956 = vpop.f32.mrb[0].mxu0
    %1957 = vdwg.mxu0
    %v1959 = vsel %vm103, %v76, 0
    %v1962 = vsel %vm103, %v77, 0
    %1964 = vmatprep.subr.mxu0 0.0
    %1965 = vmatpush1.msra.mxu0 %v101
    %1966 = vmatprep.subr.mxu0 0.0
    %1967 = vmatpush1.msra.mxu0 %v102
    %1968 = vmatprep.subr.mxu0 0.0
    %1969 = vmatpush1.msra.mxu0 0.0
    %1970 = vmatprep.subr.mxu0 0.0
    %1971 = vmatpush1.msra.mxu0 0.0
    %1972 = vmatprep.subr.mxu0 0.0
    %1973 = vmatpush1.msra.mxu0 0.0
    %1974 = vmatprep.subr.mxu0 0.0
    %1975 = vmatpush1.msra.mxu0 0.0
    %1976 = vmatprep.subr.mxu0 0.0
    %1977 = vmatpush1.msra.mxu0 0.0
    %1978 = vmatprep.subr.mxu0 0.0
    %1979 = vmatpush1.msra.mxu0 0.0
    %1980 = vmatprep.subr.mxu0 0.0
    %1981 = vmatpush1.msra.mxu0 0.0
    %1982 = vmatprep.subr.mxu0 0.0
    %1983 = vmatpush1.msra.mxu0 0.0
    %1984 = vmatprep.subr.mxu0 0.0
    %1985 = vmatpush1.msra.mxu0 0.0
    %1986 = vmatprep.subr.mxu0 0.0
    %1987 = vmatpush1.msra.mxu0 0.0
    %1988 = vmatprep.subr.mxu0 0.0
    %1989 = vmatpush1.msra.mxu0 0.0
    %1990 = vmatprep.subr.mxu0 0.0
    %1991 = vmatpush1.msra.mxu0 0.0
    %1992 = vmatprep.subr.mxu0 0.0
    %1993 = vmatpush1.msra.mxu0 0.0
    %1994 = vmatprep.subr.mxu0 0.0
    %1995 = vmatpush1.msra.mxu0 0.0
    %1996 = vmatprep.subr.mxu0 0.0
    %1997 = vmatpush1.msra.mxu0 0.0
    %1998 = vmatprep.subr.mxu0 0.0
    %1999 = vmatpush1.msra.mxu0 0.0
    %2000 = vmatprep.subr.mxu0 0.0
    %2001 = vmatpush1.msra.mxu0 0.0
    %2002 = vmatprep.subr.mxu0 0.0
    %2003 = vmatpush1.msra.mxu0 0.0
    %2004 = vmatprep.subr.mxu0 0.0
    %2005 = vmatpush1.msra.mxu0 0.0
    %2006 = vmatprep.subr.mxu0 0.0
    %2007 = vmatpush1.msra.mxu0 0.0
    %2008 = vmatprep.subr.mxu0 0.0
    %2009 = vmatpush1.msra.mxu0 0.0
    %2010 = vmatprep.subr.mxu0 0.0
    %2011 = vmatpush1.msra.mxu0 0.0
    %2012 = vmatprep.subr.mxu0 0.0
    %2013 = vmatpush1.msra.mxu0 0.0
    %2014 = vmatprep.subr.mxu0 0.0
    %2015 = vmatpush1.msra.mxu0 0.0
    %2016 = vmatprep.subr.mxu0 0.0
    %2017 = vmatpush1.msra.mxu0 0.0
    %2018 = vmatprep.subr.mxu0 0.0
    %2019 = vmatpush1.msra.mxu0 0.0
    %2020 = vmatprep.subr.mxu0 0.0
    %2021 = vmatpush1.msra.mxu0 0.0
    %2022 = vmatprep.subr.mxu0 0.0
    %2023 = vmatpush1.msra.mxu0 0.0
    %2024 = vmatprep.subr.mxu0 0.0
    %2025 = vmatpush1.msra.mxu0 0.0
    %2026 = vmatprep.subr.mxu0 0.0
    %2027 = vmatpush1.msra.mxu0 0.0
    %2028 = vmatprep.mubr.f32.mxu0 0.0
    %2029 = vmatmul.mubr.f32.gmra.mrb[0].mxu0 %v1959
    %v2030 = vpop.f32.mrb[0].mxu0
    %v2031 = vadd.f32 0.0, %v2030
    %v2032 = vpop.f32.mrb[0].mxu0
    %2033 = vmatprep.mubr.f32.mxu0 0.0
    %2034 = vmatmul.mubr.f32.gmra.mrb[0].mxu0 %v1962
    %v2035 = vpop.f32.mrb[0].mxu0
    %v2036 = vadd.f32 0.0, %v2035
    %v2037 = vpop.f32.mrb[0].mxu0
    %2038 = vdwg.mxu0
    %v2040 = vsel %vm103, %v78, 0
    %v2043 = vsel %vm103, %v79, 0
    %2045 = vmatprep.subr.mxu0 0.0
    %2046 = vmatpush1.msra.mxu0 %v101
    %2047 = vmatprep.subr.mxu0 0.0
    %2048 = vmatpush1.msra.mxu0 %v102
    %2049 = vmatprep.subr.mxu0 0.0
    %2050 = vmatpush1.msra.mxu0 0.0
    %2051 = vmatprep.subr.mxu0 0.0
    %2052 = vmatpush1.msra.mxu0 0.0
    %2053 = vmatprep.subr.mxu0 0.0
    %2054 = vmatpush1.msra.mxu0 0.0
    %2055 = vmatprep.subr.mxu0 0.0
    %2056 = vmatpush1.msra.mxu0 0.0
    %2057 = vmatprep.subr.mxu0 0.0
    %2058 = vmatpush1.msra.mxu0 0.0
    %2059 = vmatprep.subr.mxu0 0.0
    %2060 = vmatpush1.msra.mxu0 0.0
    %2061 = vmatprep.subr.mxu0 0.0
    %2062 = vmatpush1.msra.mxu0 0.0
    %2063 = vmatprep.subr.mxu0 0.0
    %2064 = vmatpush1.msra.mxu0 0.0
    %2065 = vmatprep.subr.mxu0 0.0
    %2066 = vmatpush1.msra.mxu0 0.0
    %2067 = vmatprep.subr.mxu0 0.0
    %2068 = vmatpush1.msra.mxu0 0.0
    %2069 = vmatprep.subr.mxu0 0.0
    %2070 = vmatpush1.msra.mxu0 0.0
    %2071 = vmatprep.subr.mxu0 0.0
    %2072 = vmatpush1.msra.mxu0 0.0
    %2073 = vmatprep.subr.mxu0 0.0
    %2074 = vmatpush1.msra.mxu0 0.0
    %2075 = vmatprep.subr.mxu0 0.0
    %2076 = vmatpush1.msra.mxu0 0.0
    %2077 = vmatprep.subr.mxu0 0.0
    %2078 = vmatpush1.msra.mxu0 0.0
    %2079 = vmatprep.subr.mxu0 0.0
    %2080 = vmatpush1.msra.mxu0 0.0
    %2081 = vmatprep.subr.mxu0 0.0
    %2082 = vmatpush1.msra.mxu0 0.0
    %2083 = vmatprep.subr.mxu0 0.0
    %2084 = vmatpush1.msra.mxu0 0.0
    %2085 = vmatprep.subr.mxu0 0.0
    %2086 = vmatpush1.msra.mxu0 0.0
    %2087 = vmatprep.subr.mxu0 0.0
    %2088 = vmatpush1.msra.mxu0 0.0
    %2089 = vmatprep.subr.mxu0 0.0
    %2090 = vmatpush1.msra.mxu0 0.0
    %2091 = vmatprep.subr.mxu0 0.0
    %2092 = vmatpush1.msra.mxu0 0.0
    %2093 = vmatprep.subr.mxu0 0.0
    %2094 = vmatpush1.msra.mxu0 0.0
    %2095 = vmatprep.subr.mxu0 0.0
    %2096 = vmatpush1.msra.mxu0 0.0
    %2097 = vmatprep.subr.mxu0 0.0
    %2098 = vmatpush1.msra.mxu0 0.0
    %2099 = vmatprep.subr.mxu0 0.0
    %2100 = vmatpush1.msra.mxu0 0.0
    %2101 = vmatprep.subr.mxu0 0.0
    %2102 = vmatpush1.msra.mxu0 0.0
    %2103 = vmatprep.subr.mxu0 0.0
    %2104 = vmatpush1.msra.mxu0 0.0
    %2105 = vmatprep.subr.mxu0 0.0
    %2106 = vmatpush1.msra.mxu0 0.0
    %2107 = vmatprep.subr.mxu0 0.0
    %2108 = vmatpush1.msra.mxu0 0.0
    %2109 = vmatprep.mubr.f32.mxu0 0.0
    %2110 = vmatmul.mubr.f32.gmra.mrb[0].mxu0 %v2040
    %v2111 = vpop.f32.mrb[0].mxu0
    %v2112 = vadd.f32 0.0, %v2111
    %v2113 = vpop.f32.mrb[0].mxu0
    %2114 = vmatprep.mubr.f32.mxu0 0.0
    %2115 = vmatmul.mubr.f32.gmra.mrb[0].mxu0 %v2043
    %v2116 = vpop.f32.mrb[0].mxu0
    %v2117 = vadd.f32 0.0, %v2116
    %v2118 = vpop.f32.mrb[0].mxu0
    %2119 = vdwg.mxu0
    %v2121 = vsel %vm103, %v80, 0
    %v2124 = vsel %vm103, %v81, 0
    %2126 = vmatprep.subr.mxu0 0.0
    %2127 = vmatpush1.msra.mxu0 %v101
    %2128 = vmatprep.subr.mxu0 0.0
    %2129 = vmatpush1.msra.mxu0 %v102
    %2130 = vmatprep.subr.mxu0 0.0
    %2131 = vmatpush1.msra.mxu0 0.0
    %2132 = vmatprep.subr.mxu0 0.0
    %2133 = vmatpush1.msra.mxu0 0.0
    %2134 = vmatprep.subr.mxu0 0.0
    %2135 = vmatpush1.msra.mxu0 0.0
    %2136 = vmatprep.subr.mxu0 0.0
    %2137 = vmatpush1.msra.mxu0 0.0
    %2138 = vmatprep.subr.mxu0 0.0
    %2139 = vmatpush1.msra.mxu0 0.0
    %2140 = vmatprep.subr.mxu0 0.0
    %2141 = vmatpush1.msra.mxu0 0.0
    %2142 = vmatprep.subr.mxu0 0.0
    %2143 = vmatpush1.msra.mxu0 0.0
    %2144 = vmatprep.subr.mxu0 0.0
    %2145 = vmatpush1.msra.mxu0 0.0
    %2146 = vmatprep.subr.mxu0 0.0
    %2147 = vmatpush1.msra.mxu0 0.0
    %2148 = vmatprep.subr.mxu0 0.0
    %2149 = vmatpush1.msra.mxu0 0.0
    %2150 = vmatprep.subr.mxu0 0.0
    %2151 = vmatpush1.msra.mxu0 0.0
    %2152 = vmatprep.subr.mxu0 0.0
    %2153 = vmatpush1.msra.mxu0 0.0
    %2154 = vmatprep.subr.mxu0 0.0
    %2155 = vmatpush1.msra.mxu0 0.0
    %2156 = vmatprep.subr.mxu0 0.0
    %2157 = vmatpush1.msra.mxu0 0.0
    %2158 = vmatprep.subr.mxu0 0.0
    %2159 = vmatpush1.msra.mxu0 0.0
    %2160 = vmatprep.subr.mxu0 0.0
    %2161 = vmatpush1.msra.mxu0 0.0
    %2162 = vmatprep.subr.mxu0 0.0
    %2163 = vmatpush1.msra.mxu0 0.0
    %2164 = vmatprep.subr.mxu0 0.0
    %2165 = vmatpush1.msra.mxu0 0.0
    %2166 = vmatprep.subr.mxu0 0.0
    %2167 = vmatpush1.msra.mxu0 0.0
    %2168 = vmatprep.subr.mxu0 0.0
    %2169 = vmatpush1.msra.mxu0 0.0
    %2170 = vmatprep.subr.mxu0 0.0
    %2171 = vmatpush1.msra.mxu0 0.0
    %2172 = vmatprep.subr.mxu0 0.0
    %2173 = vmatpush1.msra.mxu0 0.0
    %2174 = vmatprep.subr.mxu0 0.0
    %2175 = vmatpush1.msra.mxu0 0.0
    %2176 = vmatprep.subr.mxu0 0.0
    %2177 = vmatpush1.msra.mxu0 0.0
    %2178 = vmatprep.subr.mxu0 0.0
    %2179 = vmatpush1.msra.mxu0 0.0
    %2180 = vmatprep.subr.mxu0 0.0
    %2181 = vmatpush1.msra.mxu0 0.0
    %2182 = vmatprep.subr.mxu0 0.0
    %2183 = vmatpush1.msra.mxu0 0.0
    %2184 = vmatprep.subr.mxu0 0.0
    %2185 = vmatpush1.msra.mxu0 0.0
    %2186 = vmatprep.subr.mxu0 0.0
    %2187 = vmatpush1.msra.mxu0 0.0
    %2188 = vmatprep.subr.mxu0 0.0
    %2189 = vmatpush1.msra.mxu0 0.0
    %2190 = vmatprep.mubr.f32.mxu0 0.0
    %2191 = vmatmul.mubr.f32.gmra.mrb[0].mxu0 %v2121
    %v2192 = vpop.f32.mrb[0].mxu0
    %v2193 = vadd.f32 0.0, %v2192
    %v2194 = vpop.f32.mrb[0].mxu0
    %2195 = vmatprep.mubr.f32.mxu0 0.0
    %2196 = vmatmul.mubr.f32.gmra.mrb[0].mxu0 %v2124
    %v2197 = vpop.f32.mrb[0].mxu0
    %v2198 = vadd.f32 0.0, %v2197
    %v2199 = vpop.f32.mrb[0].mxu0
    %2200 = vdwg.mxu0
    %v2202 = vsel %vm103, %v82, 0
    %v2205 = vsel %vm103, %v83, 0
    %2207 = vmatprep.subr.mxu0 0.0
    %2208 = vmatpush1.msra.mxu0 %v101
    %2209 = vmatprep.subr.mxu0 0.0
    %2210 = vmatpush1.msra.mxu0 %v102
    %2211 = vmatprep.subr.mxu0 0.0
    %2212 = vmatpush1.msra.mxu0 0.0
    %2213 = vmatprep.subr.mxu0 0.0
    %2214 = vmatpush1.msra.mxu0 0.0
    %2215 = vmatprep.subr.mxu0 0.0
    %2216 = vmatpush1.msra.mxu0 0.0
    %2217 = vmatprep.subr.mxu0 0.0
    %2218 = vmatpush1.msra.mxu0 0.0
    %2219 = vmatprep.subr.mxu0 0.0
    %2220 = vmatpush1.msra.mxu0 0.0
    %2221 = vmatprep.subr.mxu0 0.0
    %2222 = vmatpush1.msra.mxu0 0.0
    %2223 = vmatprep.subr.mxu0 0.0
    %2224 = vmatpush1.msra.mxu0 0.0
    %2225 = vmatprep.subr.mxu0 0.0
    %2226 = vmatpush1.msra.mxu0 0.0
    %2227 = vmatprep.subr.mxu0 0.0
    %2228 = vmatpush1.msra.mxu0 0.0
    %2229 = vmatprep.subr.mxu0 0.0
    %2230 = vmatpush1.msra.mxu0 0.0
    %2231 = vmatprep.subr.mxu0 0.0
    %2232 = vmatpush1.msra.mxu0 0.0
    %2233 = vmatprep.subr.mxu0 0.0
    %2234 = vmatpush1.msra.mxu0 0.0
    %2235 = vmatprep.subr.mxu0 0.0
    %2236 = vmatpush1.msra.mxu0 0.0
    %2237 = vmatprep.subr.mxu0 0.0
    %2238 = vmatpush1.msra.mxu0 0.0
    %2239 = vmatprep.subr.mxu0 0.0
    %2240 = vmatpush1.msra.mxu0 0.0
    %2241 = vmatprep.subr.mxu0 0.0
    %2242 = vmatpush1.msra.mxu0 0.0
    %2243 = vmatprep.subr.mxu0 0.0
    %2244 = vmatpush1.msra.mxu0 0.0
    %2245 = vmatprep.subr.mxu0 0.0
    %2246 = vmatpush1.msra.mxu0 0.0
    %2247 = vmatprep.subr.mxu0 0.0
    %2248 = vmatpush1.msra.mxu0 0.0
    %2249 = vmatprep.subr.mxu0 0.0
    %2250 = vmatpush1.msra.mxu0 0.0
    %2251 = vmatprep.subr.mxu0 0.0
    %2252 = vmatpush1.msra.mxu0 0.0
    %2253 = vmatprep.subr.mxu0 0.0
    %2254 = vmatpush1.msra.mxu0 0.0
    %2255 = vmatprep.subr.mxu0 0.0
    %2256 = vmatpush1.msra.mxu0 0.0
    %2257 = vmatprep.subr.mxu0 0.0
    %2258 = vmatpush1.msra.mxu0 0.0
    %2259 = vmatprep.subr.mxu0 0.0
    %2260 = vmatpush1.msra.mxu0 0.0
    %2261 = vmatprep.subr.mxu0 0.0
    %2262 = vmatpush1.msra.mxu0 0.0
    %2263 = vmatprep.subr.mxu0 0.0
    %2264 = vmatpush1.msra.mxu0 0.0
    %2265 = vmatprep.subr.mxu0 0.0
    %2266 = vmatpush1.msra.mxu0 0.0
    %2267 = vmatprep.subr.mxu0 0.0
    %2268 = vmatpush1.msra.mxu0 0.0
    %2269 = vmatprep.subr.mxu0 0.0
    %2270 = vmatpush1.msra.mxu0 0.0
    %2271 = vmatprep.mubr.f32.mxu0 0.0
    %2272 = vmatmul.mubr.f32.gmra.mrb[0].mxu0 %v2202
    %v2273 = vpop.f32.mrb[0].mxu0
    %v2274 = vadd.f32 0.0, %v2273
    %v2275 = vpop.f32.mrb[0].mxu0
    %2276 = vmatprep.mubr.f32.mxu0 0.0
    %2277 = vmatmul.mubr.f32.gmra.mrb[0].mxu0 %v2205
    %v2278 = vpop.f32.mrb[0].mxu0
    %v2279 = vadd.f32 0.0, %v2278
    %v2280 = vpop.f32.mrb[0].mxu0
    %2281 = vdwg.mxu0
    %v2283 = vsel %vm103, %v84, 0
    %v2286 = vsel %vm103, %v85, 0
    %2288 = vmatprep.subr.mxu0 0.0
    %2289 = vmatpush1.msra.mxu0 %v101
    %2290 = vmatprep.subr.mxu0 0.0
    %2291 = vmatpush1.msra.mxu0 %v102
    %2292 = vmatprep.subr.mxu0 0.0
    %2293 = vmatpush1.msra.mxu0 0.0
    %2294 = vmatprep.subr.mxu0 0.0
    %2295 = vmatpush1.msra.mxu0 0.0
    %2296 = vmatprep.subr.mxu0 0.0
    %2297 = vmatpush1.msra.mxu0 0.0
    %2298 = vmatprep.subr.mxu0 0.0
    %2299 = vmatpush1.msra.mxu0 0.0
    %2300 = vmatprep.subr.mxu0 0.0
    %2301 = vmatpush1.msra.mxu0 0.0
    %2302 = vmatprep.subr.mxu0 0.0
    %2303 = vmatpush1.msra.mxu0 0.0
    %2304 = vmatprep.subr.mxu0 0.0
    %2305 = vmatpush1.msra.mxu0 0.0
    %2306 = vmatprep.subr.mxu0 0.0
    %2307 = vmatpush1.msra.mxu0 0.0
    %2308 = vmatprep.subr.mxu0 0.0
    %2309 = vmatpush1.msra.mxu0 0.0
    %2310 = vmatprep.subr.mxu0 0.0
    %2311 = vmatpush1.msra.mxu0 0.0
    %2312 = vmatprep.subr.mxu0 0.0
    %2313 = vmatpush1.msra.mxu0 0.0
    %2314 = vmatprep.subr.mxu0 0.0
    %2315 = vmatpush1.msra.mxu0 0.0
    %2316 = vmatprep.subr.mxu0 0.0
    %2317 = vmatpush1.msra.mxu0 0.0
    %2318 = vmatprep.subr.mxu0 0.0
    %2319 = vmatpush1.msra.mxu0 0.0
    %2320 = vmatprep.subr.mxu0 0.0
    %2321 = vmatpush1.msra.mxu0 0.0
    %2322 = vmatprep.subr.mxu0 0.0
    %2323 = vmatpush1.msra.mxu0 0.0
    %2324 = vmatprep.subr.mxu0 0.0
    %2325 = vmatpush1.msra.mxu0 0.0
    %2326 = vmatprep.subr.mxu0 0.0
    %2327 = vmatpush1.msra.mxu0 0.0
    %2328 = vmatprep.subr.mxu0 0.0
    %2329 = vmatpush1.msra.mxu0 0.0
    %2330 = vmatprep.subr.mxu0 0.0
    %2331 = vmatpush1.msra.mxu0 0.0
    %2332 = vmatprep.subr.mxu0 0.0
    %2333 = vmatpush1.msra.mxu0 0.0
    %2334 = vmatprep.subr.mxu0 0.0
    %2335 = vmatpush1.msra.mxu0 0.0
    %2336 = vmatprep.subr.mxu0 0.0
    %2337 = vmatpush1.msra.mxu0 0.0
    %2338 = vmatprep.subr.mxu0 0.0
    %2339 = vmatpush1.msra.mxu0 0.0
    %2340 = vmatprep.subr.mxu0 0.0
    %2341 = vmatpush1.msra.mxu0 0.0
    %2342 = vmatprep.subr.mxu0 0.0
    %2343 = vmatpush1.msra.mxu0 0.0
    %2344 = vmatprep.subr.mxu0 0.0
    %2345 = vmatpush1.msra.mxu0 0.0
    %2346 = vmatprep.subr.mxu0 0.0
    %2347 = vmatpush1.msra.mxu0 0.0
    %2348 = vmatprep.subr.mxu0 0.0
    %2349 = vmatpush1.msra.mxu0 0.0
    %2350 = vmatprep.subr.mxu0 0.0
    %2351 = vmatpush1.msra.mxu0 0.0
    %2352 = vmatprep.mubr.f32.mxu0 0.0
    %2353 = vmatmul.mubr.f32.gmra.mrb[0].mxu0 %v2283
    %v2354 = vpop.f32.mrb[0].mxu0
    %v2355 = vadd.f32 0.0, %v2354
    %v2356 = vpop.f32.mrb[0].mxu0
    %2357 = vmatprep.mubr.f32.mxu0 0.0
    %2358 = vmatmul.mubr.f32.gmra.mrb[0].mxu0 %v2286
    %v2359 = vpop.f32.mrb[0].mxu0
    %v2360 = vadd.f32 0.0, %v2359
    %v2361 = vpop.f32.mrb[0].mxu0
    %2362 = vdwg.mxu0
    %v2364 = vsel %vm103, %v86, 0
    %v2367 = vsel %vm103, %v87, 0
    %2369 = vmatprep.subr.mxu0 0.0
    %2370 = vmatpush1.msra.mxu0 %v101
    %2371 = vmatprep.subr.mxu0 0.0
    %2372 = vmatpush1.msra.mxu0 %v102
    %2373 = vmatprep.subr.mxu0 0.0
    %2374 = vmatpush1.msra.mxu0 0.0
    %2375 = vmatprep.subr.mxu0 0.0
    %2376 = vmatpush1.msra.mxu0 0.0
    %2377 = vmatprep.subr.mxu0 0.0
    %2378 = vmatpush1.msra.mxu0 0.0
    %2379 = vmatprep.subr.mxu0 0.0
    %2380 = vmatpush1.msra.mxu0 0.0
    %2381 = vmatprep.subr.mxu0 0.0
    %2382 = vmatpush1.msra.mxu0 0.0
    %2383 = vmatprep.subr.mxu0 0.0
    %2384 = vmatpush1.msra.mxu0 0.0
    %2385 = vmatprep.subr.mxu0 0.0
    %2386 = vmatpush1.msra.mxu0 0.0
    %2387 = vmatprep.subr.mxu0 0.0
    %2388 = vmatpush1.msra.mxu0 0.0
    %2389 = vmatprep.subr.mxu0 0.0
    %2390 = vmatpush1.msra.mxu0 0.0
    %2391 = vmatprep.subr.mxu0 0.0
    %2392 = vmatpush1.msra.mxu0 0.0
    %2393 = vmatprep.subr.mxu0 0.0
    %2394 = vmatpush1.msra.mxu0 0.0
    %2395 = vmatprep.subr.mxu0 0.0
    %2396 = vmatpush1.msra.mxu0 0.0
    %2397 = vmatprep.subr.mxu0 0.0
    %2398 = vmatpush1.msra.mxu0 0.0
    %2399 = vmatprep.subr.mxu0 0.0
    %2400 = vmatpush1.msra.mxu0 0.0
    %2401 = vmatprep.subr.mxu0 0.0
    %2402 = vmatpush1.msra.mxu0 0.0
    %2403 = vmatprep.subr.mxu0 0.0
    %2404 = vmatpush1.msra.mxu0 0.0
    %2405 = vmatprep.subr.mxu0 0.0
    %2406 = vmatpush1.msra.mxu0 0.0
    %2407 = vmatprep.subr.mxu0 0.0
    %2408 = vmatpush1.msra.mxu0 0.0
    %2409 = vmatprep.subr.mxu0 0.0
    %2410 = vmatpush1.msra.mxu0 0.0
    %2411 = vmatprep.subr.mxu0 0.0
    %2412 = vmatpush1.msra.mxu0 0.0
    %2413 = vmatprep.subr.mxu0 0.0
    %2414 = vmatpush1.msra.mxu0 0.0
    %2415 = vmatprep.subr.mxu0 0.0
    %2416 = vmatpush1.msra.mxu0 0.0
    %2417 = vmatprep.subr.mxu0 0.0
    %2418 = vmatpush1.msra.mxu0 0.0
    %2419 = vmatprep.subr.mxu0 0.0
    %2420 = vmatpush1.msra.mxu0 0.0
    %2421 = vmatprep.subr.mxu0 0.0
    %2422 = vmatpush1.msra.mxu0 0.0
    %2423 = vmatprep.subr.mxu0 0.0
    %2424 = vmatpush1.msra.mxu0 0.0
    %2425 = vmatprep.subr.mxu0 0.0
    %2426 = vmatpush1.msra.mxu0 0.0
    %2427 = vmatprep.subr.mxu0 0.0
    %2428 = vmatpush1.msra.mxu0 0.0
    %2429 = vmatprep.subr.mxu0 0.0
    %2430 = vmatpush1.msra.mxu0 0.0
    %2431 = vmatprep.subr.mxu0 0.0
    %2432 = vmatpush1.msra.mxu0 0.0
    %2433 = vmatprep.mubr.f32.mxu0 0.0
    %2434 = vmatmul.mubr.f32.gmra.mrb[0].mxu0 %v2364
    %v2435 = vpop.f32.mrb[0].mxu0
    %v2436 = vadd.f32 0.0, %v2435
    %v2437 = vpop.f32.mrb[0].mxu0
    %2438 = vmatprep.mubr.f32.mxu0 0.0
    %2439 = vmatmul.mubr.f32.gmra.mrb[0].mxu0 %v2367
    %v2440 = vpop.f32.mrb[0].mxu0
    %v2441 = vadd.f32 0.0, %v2440
    %v2442 = vpop.f32.mrb[0].mxu0
    %2443 = vdwg.mxu0
    %v2445 = vsel %vm103, %v88, 0
    %v2448 = vsel %vm103, %v89, 0
    %2450 = vmatprep.subr.mxu0 0.0
    %2451 = vmatpush1.msra.mxu0 %v101
    %2452 = vmatprep.subr.mxu0 0.0
    %2453 = vmatpush1.msra.mxu0 %v102
    %2454 = vmatprep.subr.mxu0 0.0
    %2455 = vmatpush1.msra.mxu0 0.0
    %2456 = vmatprep.subr.mxu0 0.0
    %2457 = vmatpush1.msra.mxu0 0.0
    %2458 = vmatprep.subr.mxu0 0.0
    %2459 = vmatpush1.msra.mxu0 0.0
    %2460 = vmatprep.subr.mxu0 0.0
    %2461 = vmatpush1.msra.mxu0 0.0
    %2462 = vmatprep.subr.mxu0 0.0
    %2463 = vmatpush1.msra.mxu0 0.0
    %2464 = vmatprep.subr.mxu0 0.0
    %2465 = vmatpush1.msra.mxu0 0.0
    %2466 = vmatprep.subr.mxu0 0.0
    %2467 = vmatpush1.msra.mxu0 0.0
    %2468 = vmatprep.subr.mxu0 0.0
    %2469 = vmatpush1.msra.mxu0 0.0
    %2470 = vmatprep.subr.mxu0 0.0
    %2471 = vmatpush1.msra.mxu0 0.0
    %2472 = vmatprep.subr.mxu0 0.0
    %2473 = vmatpush1.msra.mxu0 0.0
    %2474 = vmatprep.subr.mxu0 0.0
    %2475 = vmatpush1.msra.mxu0 0.0
    %2476 = vmatprep.subr.mxu0 0.0
    %2477 = vmatpush1.msra.mxu0 0.0
    %2478 = vmatprep.subr.mxu0 0.0
    %2479 = vmatpush1.msra.mxu0 0.0
    %2480 = vmatprep.subr.mxu0 0.0
    %2481 = vmatpush1.msra.mxu0 0.0
    %2482 = vmatprep.subr.mxu0 0.0
    %2483 = vmatpush1.msra.mxu0 0.0
    %2484 = vmatprep.subr.mxu0 0.0
    %2485 = vmatpush1.msra.mxu0 0.0
    %2486 = vmatprep.subr.mxu0 0.0
    %2487 = vmatpush1.msra.mxu0 0.0
    %2488 = vmatprep.subr.mxu0 0.0
    %2489 = vmatpush1.msra.mxu0 0.0
    %2490 = vmatprep.subr.mxu0 0.0
    %2491 = vmatpush1.msra.mxu0 0.0
    %2492 = vmatprep.subr.mxu0 0.0
    %2493 = vmatpush1.msra.mxu0 0.0
    %2494 = vmatprep.subr.mxu0 0.0
    %2495 = vmatpush1.msra.mxu0 0.0
    %2496 = vmatprep.subr.mxu0 0.0
    %2497 = vmatpush1.msra.mxu0 0.0
    %2498 = vmatprep.subr.mxu0 0.0
    %2499 = vmatpush1.msra.mxu0 0.0
    %2500 = vmatprep.subr.mxu0 0.0
    %2501 = vmatpush1.msra.mxu0 0.0
    %2502 = vmatprep.subr.mxu0 0.0
    %2503 = vmatpush1.msra.mxu0 0.0
    %2504 = vmatprep.subr.mxu0 0.0
    %2505 = vmatpush1.msra.mxu0 0.0
    %2506 = vmatprep.subr.mxu0 0.0
    %2507 = vmatpush1.msra.mxu0 0.0
    %2508 = vmatprep.subr.mxu0 0.0
    %2509 = vmatpush1.msra.mxu0 0.0
    %2510 = vmatprep.subr.mxu0 0.0
    %2511 = vmatpush1.msra.mxu0 0.0
    %2512 = vmatprep.subr.mxu0 0.0
    %2513 = vmatpush1.msra.mxu0 0.0
    %2514 = vmatprep.mubr.f32.mxu0 0.0
    %2515 = vmatmul.mubr.f32.gmra.mrb[0].mxu0 %v2445
    %v2516 = vpop.f32.mrb[0].mxu0
    %v2517 = vadd.f32 0.0, %v2516
    %v2518 = vpop.f32.mrb[0].mxu0
    %2519 = vmatprep.mubr.f32.mxu0 0.0
    %2520 = vmatmul.mubr.f32.gmra.mrb[0].mxu0 %v2448
    %v2521 = vpop.f32.mrb[0].mxu0
    %v2522 = vadd.f32 0.0, %v2521
    %v2523 = vpop.f32.mrb[0].mxu0
    %2524 = vdwg.mxu0
    %v2526 = vsel %vm103, %v90, 0
    %v2529 = vsel %vm103, %v91, 0
    %2531 = vmatprep.subr.mxu0 0.0
    %2532 = vmatpush1.msra.mxu0 %v101
    %2533 = vmatprep.subr.mxu0 0.0
    %2534 = vmatpush1.msra.mxu0 %v102
    %2535 = vmatprep.subr.mxu0 0.0
    %2536 = vmatpush1.msra.mxu0 0.0
    %2537 = vmatprep.subr.mxu0 0.0
    %2538 = vmatpush1.msra.mxu0 0.0
    %2539 = vmatprep.subr.mxu0 0.0
    %2540 = vmatpush1.msra.mxu0 0.0
    %2541 = vmatprep.subr.mxu0 0.0
    %2542 = vmatpush1.msra.mxu0 0.0
    %2543 = vmatprep.subr.mxu0 0.0
    %2544 = vmatpush1.msra.mxu0 0.0
    %2545 = vmatprep.subr.mxu0 0.0
    %2546 = vmatpush1.msra.mxu0 0.0
    %2547 = vmatprep.subr.mxu0 0.0
    %2548 = vmatpush1.msra.mxu0 0.0
    %2549 = vmatprep.subr.mxu0 0.0
    %2550 = vmatpush1.msra.mxu0 0.0
    %2551 = vmatprep.subr.mxu0 0.0
    %2552 = vmatpush1.msra.mxu0 0.0
    %2553 = vmatprep.subr.mxu0 0.0
    %2554 = vmatpush1.msra.mxu0 0.0
    %2555 = vmatprep.subr.mxu0 0.0
    %2556 = vmatpush1.msra.mxu0 0.0
    %2557 = vmatprep.subr.mxu0 0.0
    %2558 = vmatpush1.msra.mxu0 0.0
    %2559 = vmatprep.subr.mxu0 0.0
    %2560 = vmatpush1.msra.mxu0 0.0
    %2561 = vmatprep.subr.mxu0 0.0
    %2562 = vmatpush1.msra.mxu0 0.0
    %2563 = vmatprep.subr.mxu0 0.0
    %2564 = vmatpush1.msra.mxu0 0.0
    %2565 = vmatprep.subr.mxu0 0.0
    %2566 = vmatpush1.msra.mxu0 0.0
    %2567 = vmatprep.subr.mxu0 0.0
    %2568 = vmatpush1.msra.mxu0 0.0
    %2569 = vmatprep.subr.mxu0 0.0
    %2570 = vmatpush1.msra.mxu0 0.0
    %2571 = vmatprep.subr.mxu0 0.0
    %2572 = vmatpush1.msra.mxu0 0.0
    %2573 = vmatprep.subr.mxu0 0.0
    %2574 = vmatpush1.msra.mxu0 0.0
    %2575 = vmatprep.subr.mxu0 0.0
    %2576 = vmatpush1.msra.mxu0 0.0
    %2577 = vmatprep.subr.mxu0 0.0
    %2578 = vmatpush1.msra.mxu0 0.0
    %2579 = vmatprep.subr.mxu0 0.0
    %2580 = vmatpush1.msra.mxu0 0.0
    %2581 = vmatprep.subr.mxu0 0.0
    %2582 = vmatpush1.msra.mxu0 0.0
    %2583 = vmatprep.subr.mxu0 0.0
    %2584 = vmatpush1.msra.mxu0 0.0
    %2585 = vmatprep.subr.mxu0 0.0
    %2586 = vmatpush1.msra.mxu0 0.0
    %2587 = vmatprep.subr.mxu0 0.0
    %2588 = vmatpush1.msra.mxu0 0.0
    %2589 = vmatprep.subr.mxu0 0.0
    %2590 = vmatpush1.msra.mxu0 0.0
    %2591 = vmatprep.subr.mxu0 0.0
    %2592 = vmatpush1.msra.mxu0 0.0
    %2593 = vmatprep.subr.mxu0 0.0
    %2594 = vmatpush1.msra.mxu0 0.0
    %2595 = vmatprep.mubr.f32.mxu0 0.0
    %2596 = vmatmul.mubr.f32.gmra.mrb[0].mxu0 %v2526
    %v2597 = vpop.f32.mrb[0].mxu0
    %v2598 = vadd.f32 0.0, %v2597
    %v2599 = vpop.f32.mrb[0].mxu0
    %2600 = vmatprep.mubr.f32.mxu0 0.0
    %2601 = vmatmul.mubr.f32.gmra.mrb[0].mxu0 %v2529
    %v2602 = vpop.f32.mrb[0].mxu0
    %v2603 = vadd.f32 0.0, %v2602
    %v2604 = vpop.f32.mrb[0].mxu0
    %2605 = vdwg.mxu0
    %v2606 = vsub.f32 %v60, %v177
    %v2607 = vsub.f32 %v61, %v182
    %v2608 = vsub.f32 %v62, %v252
    %v2609 = vsub.f32 %v63, %v257
    %v2610 = vsub.f32 %v64, %v327
    %v2611 = vsub.f32 %v65, %v332
    %v2612 = vsub.f32 %v66, %v402
    %v2613 = vsub.f32 %v67, %v407
    %v2614 = vsub.f32 %v68, %v477
    %v2615 = vsub.f32 %v69, %v482
    %v2616 = vsub.f32 %v70, %v552
    %v2617 = vsub.f32 %v71, %v557
    %v2618 = vsub.f32 %v72, %v627
    %v2619 = vsub.f32 %v73, %v632
    %v2620 = vsub.f32 %v74, %v702
    %v2621 = vsub.f32 %v75, %v707
    %v2622 = vand.u32 2147483647, %v2606
    %v2623 = vand.u32 2147483647, %v2607
    %v2624 = vand.u32 2147483647, %v2608
    %v2625 = vand.u32 2147483647, %v2609
    %v2626 = vand.u32 2147483647, %v2610
    %v2627 = vand.u32 2147483647, %v2611
    %v2628 = vand.u32 2147483647, %v2612
    %v2629 = vand.u32 2147483647, %v2613
    %v2630 = vand.u32 2147483647, %v2614
    %v2631 = vand.u32 2147483647, %v2615
    %v2632 = vand.u32 2147483647, %v2616
    %v2633 = vand.u32 2147483647, %v2617
    %v2634 = vand.u32 2147483647, %v2618
    %v2635 = vand.u32 2147483647, %v2619
    %v2636 = vand.u32 2147483647, %v2620
    %v2637 = vand.u32 2147483647, %v2621
    %v2638 = vsub.f32 %v76, %v777
    %v2639 = vsub.f32 %v77, %v782
    %v2640 = vsub.f32 %v78, %v852
    %v2641 = vsub.f32 %v79, %v857
    %v2642 = vsub.f32 %v80, %v927
    %v2643 = vsub.f32 %v81, %v932
    %v2644 = vsub.f32 %v82, %v1002
    %v2645 = vsub.f32 %v83, %v1007
    %v2646 = vsub.f32 %v84, %v1077
    %v2647 = vsub.f32 %v85, %v1082
    %v2648 = vsub.f32 %v86, %v1152
    %v2649 = vsub.f32 %v87, %v1157
    %v2650 = vsub.f32 %v88, %v1227
    %v2651 = vsub.f32 %v89, %v1232
    %v2652 = vsub.f32 %v90, %v1302
    %v2653 = vsub.f32 %v91, %v1307
    %v2654 = vand.u32 2147483647, %v2638
    %v2655 = vand.u32 2147483647, %v2639
    %v2656 = vand.u32 2147483647, %v2640
    %v2657 = vand.u32 2147483647, %v2641
    %v2658 = vand.u32 2147483647, %v2642
    %v2659 = vand.u32 2147483647, %v2643
    %v2660 = vand.u32 2147483647, %v2644
    %v2661 = vand.u32 2147483647, %v2645
    %v2662 = vand.u32 2147483647, %v2646
    %v2663 = vand.u32 2147483647, %v2647
    %v2664 = vand.u32 2147483647, %v2648
    %v2665 = vand.u32 2147483647, %v2649
    %v2666 = vand.u32 2147483647, %v2650
    %v2667 = vand.u32 2147483647, %v2651
    %v2668 = vand.u32 2147483647, %v2652
    %v2669 = vand.u32 2147483647, %v2653
    %v2670 = vsub.f32 %v2622, %v2654
    %v2671 = vsub.f32 %v2623, %v2655
    %v2672 = vsub.f32 %v2624, %v2656
    %v2673 = vsub.f32 %v2625, %v2657
    %v2674 = vsub.f32 %v2626, %v2658
    %v2675 = vsub.f32 %v2627, %v2659
    %v2676 = vsub.f32 %v2628, %v2660
    %v2677 = vsub.f32 %v2629, %v2661
    %v2678 = vsub.f32 %v2630, %v2662
    %v2679 = vsub.f32 %v2631, %v2663
    %v2680 = vsub.f32 %v2632, %v2664
    %v2681 = vsub.f32 %v2633, %v2665
    %v2682 = vsub.f32 %v2634, %v2666
    %v2683 = vsub.f32 %v2635, %v2667
    %v2684 = vsub.f32 %v2636, %v2668
    %v2685 = vsub.f32 %v2637, %v2669
    %v2686 = vsub.f32 %v1383, %v60
    %v2687 = vsub.f32 %v1388, %v61
    %v2688 = vsub.f32 %v1464, %v62
    %v2689 = vsub.f32 %v1469, %v63
    %v2690 = vsub.f32 %v1545, %v64
    %v2691 = vsub.f32 %v1550, %v65
    %v2692 = vsub.f32 %v1626, %v66
    %v2693 = vsub.f32 %v1631, %v67
    %v2694 = vsub.f32 %v1707, %v68
    %v2695 = vsub.f32 %v1712, %v69
    %v2696 = vsub.f32 %v1788, %v70
    %v2697 = vsub.f32 %v1793, %v71
    %v2698 = vsub.f32 %v1869, %v72
    %v2699 = vsub.f32 %v1874, %v73
    %v2700 = vsub.f32 %v1950, %v74
    %v2701 = vsub.f32 %v1955, %v75
    %v2702 = vand.u32 2147483647, %v2686
    %v2703 = vand.u32 2147483647, %v2687
    %v2704 = vand.u32 2147483647, %v2688
    %v2705 = vand.u32 2147483647, %v2689
    %v2706 = vand.u32 2147483647, %v2690
    %v2707 = vand.u32 2147483647, %v2691
    %v2708 = vand.u32 2147483647, %v2692
    %v2709 = vand.u32 2147483647, %v2693
    %v2710 = vand.u32 2147483647, %v2694
    %v2711 = vand.u32 2147483647, %v2695
    %v2712 = vand.u32 2147483647, %v2696
    %v2713 = vand.u32 2147483647, %v2697
    %v2714 = vand.u32 2147483647, %v2698
    %v2715 = vand.u32 2147483647, %v2699
    %v2716 = vand.u32 2147483647, %v2700
    %v2717 = vand.u32 2147483647, %v2701
    %v2718 = vsub.f32 %v2031, %v76
    %v2719 = vsub.f32 %v2036, %v77
    %v2720 = vsub.f32 %v2112, %v78
    %v2721 = vsub.f32 %v2117, %v79
    %v2722 = vsub.f32 %v2193, %v80
    %v2723 = vsub.f32 %v2198, %v81
    %v2724 = vsub.f32 %v2274, %v82
    %v2725 = vsub.f32 %v2279, %v83
    %v2726 = vsub.f32 %v2355, %v84
    %v2727 = vsub.f32 %v2360, %v85
    %v2728 = vsub.f32 %v2436, %v86
    %v2729 = vsub.f32 %v2441, %v87
    %v2730 = vsub.f32 %v2517, %v88
    %v2731 = vsub.f32 %v2522, %v89
    %v2732 = vsub.f32 %v2598, %v90
    %v2733 = vsub.f32 %v2603, %v91
    %v2734 = vand.u32 2147483647, %v2718
    %v2735 = vand.u32 2147483647, %v2719
    %v2736 = vand.u32 2147483647, %v2720
    %v2737 = vand.u32 2147483647, %v2721
    %v2738 = vand.u32 2147483647, %v2722
    %v2739 = vand.u32 2147483647, %v2723
    %v2740 = vand.u32 2147483647, %v2724
    %v2741 = vand.u32 2147483647, %v2725
    %v2742 = vand.u32 2147483647, %v2726
    %v2743 = vand.u32 2147483647, %v2727
    %v2744 = vand.u32 2147483647, %v2728
    %v2745 = vand.u32 2147483647, %v2729
    %v2746 = vand.u32 2147483647, %v2730
    %v2747 = vand.u32 2147483647, %v2731
    %v2748 = vand.u32 2147483647, %v2732
    %v2749 = vand.u32 2147483647, %v2733
    %v2750 = vsub.f32 %v2702, %v2734
    %v2751 = vsub.f32 %v2703, %v2735
    %v2752 = vsub.f32 %v2704, %v2736
    %v2753 = vsub.f32 %v2705, %v2737
    %v2754 = vsub.f32 %v2706, %v2738
    %v2755 = vsub.f32 %v2707, %v2739
    %v2756 = vsub.f32 %v2708, %v2740
    %v2757 = vsub.f32 %v2709, %v2741
    %v2758 = vsub.f32 %v2710, %v2742
    %v2759 = vsub.f32 %v2711, %v2743
    %v2760 = vsub.f32 %v2712, %v2744
    %v2761 = vsub.f32 %v2713, %v2745
    %v2762 = vsub.f32 %v2714, %v2746
    %v2763 = vsub.f32 %v2715, %v2747
    %v2764 = vsub.f32 %v2716, %v2748
    %v2765 = vsub.f32 %v2717, %v2749
    %v2766 = vmul.f32 %v2670, %v2670
    %v2767 = vmul.f32 %v2671, %v2671
    %v2768 = vmul.f32 %v2672, %v2672
    %v2769 = vmul.f32 %v2673, %v2673
    %v2770 = vmul.f32 %v2674, %v2674
    %v2771 = vmul.f32 %v2675, %v2675
    %v2772 = vmul.f32 %v2676, %v2676
    %v2773 = vmul.f32 %v2677, %v2677
    %v2774 = vmul.f32 %v2678, %v2678
    %v2775 = vmul.f32 %v2679, %v2679
    %v2776 = vmul.f32 %v2680, %v2680
    %v2777 = vmul.f32 %v2681, %v2681
    %v2778 = vmul.f32 %v2682, %v2682
    %v2779 = vmul.f32 %v2683, %v2683
    %v2780 = vmul.f32 %v2684, %v2684
    %v2781 = vmul.f32 %v2685, %v2685
    %v2782 = vmul.f32 %v2750, %v2750
    %v2783 = vmul.f32 %v2751, %v2751
    %v2784 = vmul.f32 %v2752, %v2752
    %v2785 = vmul.f32 %v2753, %v2753
    %v2786 = vmul.f32 %v2754, %v2754
    %v2787 = vmul.f32 %v2755, %v2755
    %v2788 = vmul.f32 %v2756, %v2756
    %v2789 = vmul.f32 %v2757, %v2757
    %v2790 = vmul.f32 %v2758, %v2758
    %v2791 = vmul.f32 %v2759, %v2759
    %v2792 = vmul.f32 %v2760, %v2760
    %v2793 = vmul.f32 %v2761, %v2761
    %v2794 = vmul.f32 %v2762, %v2762
    %v2795 = vmul.f32 %v2763, %v2763
    %v2796 = vmul.f32 %v2764, %v2764
    %v2797 = vmul.f32 %v2765, %v2765
    %v2798 = vadd.f32 %v2766, %v2782
    %v2799 = vadd.f32 %v2767, %v2783
    %v2800 = vadd.f32 %v2768, %v2784
    %v2801 = vadd.f32 %v2769, %v2785
    %v2802 = vadd.f32 %v2770, %v2786
    %v2803 = vadd.f32 %v2771, %v2787
    %v2804 = vadd.f32 %v2772, %v2788
    %v2805 = vadd.f32 %v2773, %v2789
    %v2806 = vadd.f32 %v2774, %v2790
    %v2807 = vadd.f32 %v2775, %v2791
    %v2808 = vadd.f32 %v2776, %v2792
    %v2809 = vadd.f32 %v2777, %v2793
    %v2810 = vadd.f32 %v2778, %v2794
    %v2811 = vadd.f32 %v2779, %v2795
    %v2812 = vadd.f32 %v2780, %v2796
    %v2813 = vadd.f32 %v2781, %v2797
    %v2814 = vsel %vm103, %v2798, 0.0
    %v2815 = vsel %vm103, %v2800, 0.0
    %v2816 = vadd.f32 %v2814, %v2815
    %v2817 = vsel %vm103, %v2802, 0.0
    %v2818 = vadd.f32 %v2816, %v2817
    %v2819 = vsel %vm103, %v2804, 0.0
    %v2820 = vadd.f32 %v2818, %v2819
    %v2821 = vsel %vm103, %v2806, 0.0
    %v2822 = vadd.f32 %v2820, %v2821
    %v2823 = vsel %vm103, %v2808, 0.0
    %v2824 = vadd.f32 %v2822, %v2823
    %v2825 = vsel %vm103, %v2810, 0.0
    %v2826 = vadd.f32 %v2824, %v2825
    %v2827 = vsel %vm103, %v2812, 0.0
    %v2828 = vadd.f32 %v2826, %v2827
    %v2829 = vsel %vm103, %v2799, 0.0
    %v2830 = vsel %vm103, %v2801, 0.0
    %v2831 = vadd.f32 %v2829, %v2830
    %v2832 = vsel %vm103, %v2803, 0.0
    %v2833 = vadd.f32 %v2831, %v2832
    %v2834 = vsel %vm103, %v2805, 0.0
    %v2835 = vadd.f32 %v2833, %v2834
    %v2836 = vsel %vm103, %v2807, 0.0
    %v2837 = vadd.f32 %v2835, %v2836
    %v2838 = vsel %vm103, %v2809, 0.0
    %v2839 = vadd.f32 %v2837, %v2838
    %v2840 = vsel %vm103, %v2811, 0.0
    %v2841 = vadd.f32 %v2839, %v2840
    %v2842 = vsel %vm103, %v2813, 0.0
    %v2843 = vadd.f32 %v2841, %v2842
    %v2844 = vld [vmem:[#allocation2] sm:$0x1]
    %v2845 = vsel %vm103, %v2828, 0.0
    %v2846 = vsel %vm103, %v2843, 0.0
    %v2847 = vadd.f32 %v2845, %v2846
    %v2848 = vrot.slane %v2847, 4
    %v2849 = vadd.f32 %v2847, %v2848
    %v2850 = vrot.slane %v2849, 2
    %v2851 = vadd.f32 %v2849, %v2850
    %v2852 = vrot.slane %v2851, 1
    %v2853 = vadd.f32 %v2851, %v2852
    %v2854 = vadd.f32 %v2844, %v2853
    %vm2855 = vcmask 122880
    %2856 = vst.msk [vmem:[#allocation2] sm:$0x1] %vm2855, %v2854
    // Predicated region
    $region22: #{tpu_custom_call.1} parent=1 // pred_check
      %p2857 = pneg %p54
    $region23: #{tpu_custom_call.1} parent=1 // pred_check_branch
      %2859 = sbr.rel (%p2857) target = $region25
    $region24: #{tpu_custom_call.1} parent=1 // pred_region
      %v2860 = vld [vmem:[#allocation2] sm:$0x1]
      %v2861 = vsel %vm2855, %v2860, 0.0
      %2862 = vadd.xlane.f32.xlu0 %v2861
      %v2863 = vpop.xlane.xlu0 %2862
      %v2864 = vrot.slane %v2863, 4
      %v2865 = vadd.f32 %v2863, %v2864
      %v2866 = vrot.slane %v2865, 2
      %v2867 = vadd.f32 %v2865, %v2866
      %v2868 = vrot.slane %v2867, 1
      %v2869 = vadd.f32 %v2867, %v2868
      %s2870 = vtos %v2869
      %v2871 = vstv %s2870
      %2872 = vst [vmem:[#allocation8] sm:$0x1] %v2871
    $region25: #{tpu_custom_call.1} parent=1 // pred_fallthru
      _
    // Predicated region
    $region26: #{tpu_custom_call.1} parent=1 // pred_check
      _
    $region27: #{tpu_custom_call.1} parent=1 // pred_check_branch
      %2874 = sbr.rel (0) target = $region29
    $region28: #{tpu_custom_call.1} parent=1 // pred_region
      %s2876 = ssub.s32 16, 16
      %2877 = vsyncadd [#allocation5], %s2876
      %s2879 = sshll.u32 [#allocation8], 4
      %s2880 = int_to_ptr.vmem [resolvable:$true] %s2879
      %2882 = dma.vmem_to_hbm [thread:$0]  %s2880, 16, %s2, [#allocation5]
    $region29: #{tpu_custom_call.1} parent=1 // pred_fallthru
      _
    // Predicated region
    $region30: #{tpu_custom_call.1} parent=1 // pred_check
      _
    $region31: #{tpu_custom_call.1} parent=1 // pred_check_branch
      %2884 = sbr.rel (0) target = $region33
    $region32: #{tpu_custom_call.1} parent=1 // pred_region
      %2885 = dma.done [#allocation5], 16
    $region33: #{tpu_custom_call.1} parent=1 // pred_fallthru
      _
    %2886 = vsyncpa [#allocation4], 1
    %2887 = vsyncpa [#allocation7], 1
    %2888 = vsyncpa [#allocation5], 1

</llo_original>
